<compile_context>
chip_gen: v5e
topology: v5e:2x2
jax: 0.10.0
libtpu: 0.0.40
codegen_flags: <defaults>
</compile_context>

<pallas_src>
import jax
import jax.numpy as jnp
from jax.experimental import pallas as pl
from jax.experimental.pallas import tpu as pltpu

EPS = 1e-5
NEG_SLOPE = 0.2
_HIGH = jax.lax.Precision.HIGHEST


def _round_up(x, m):
    return (x + m - 1) // m * m


def _vmem_limit_bytes():
    """Generation-aware scoped-VMEM limit with a conservative fallback."""
    try:
        cap = getattr(pltpu.get_tpu_info(), "vmem_capacity_bytes", None)
        if cap:
            return int(min(cap * 3 // 4, 96 * 1024 * 1024))
    except Exception:
        pass
    return 32 * 1024 * 1024


def conv_layer_gen(x, conv_w, conv_b, bn_gamma, bn_beta, *, precision=_HIGH):
    """x: (N, Cin, H, W) f32 NCHW -> (N, Cout, OH, OW) f32 NCHW.

    conv_b is accepted for API parity but never enters the kernels: under training-mode
    BatchNorm the per-channel bias is cancelled exactly by the mean subtraction.
    """
    del conv_b  # exactly cancelled by BN mean subtraction (training-mode stats)
    n, cin, h, w = x.shape
    cout = conv_w.shape[0]

    # PyTorch: F.pad(x,(0,1,0,1)) then Conv2d(k=3, s=2, pad=0).
    oh = (h - 2) // 2 + 1
    ow = (w - 2) // 2 + 1
    ohp, owp = oh + 1, ow + 1          # parity-plane extents (one junk row/col)
    s = ohp * owp                      # flattened padded spatial extent
    sx = _round_up(s + owp + 1, 128)   # + max tap shift, rounded to lane multiple

    # ---- XLA-side prep (one input-sized copy): zero-pad to (2*OHp, 2*OWp) — this covers
    # F.pad's bottom/right zero row/col — split rows & cols by parity, flatten spatial,
    # and zero-pad the flat axis so every tap window is an in-bounds static slice.
    xpad = jnp.pad(x.astype(jnp.float32),
                   ((0, 0), (0, 0), (0, 2 * ohp - h), (0, 2 * owp - w)))
    planes = xpad.reshape(n, cin, ohp, 2, owp, 2).transpose(0, 3, 5, 1, 2, 4)
    xs = planes.reshape(n, 4, cin, s)                      # plane index = rp*2 + cp
    xs = jnp.pad(xs, ((0, 0), (0, 0), (0, 0), (0, sx - s)))

    # Per-tap weights: w9[di*3 + dj] = conv_w[:, :, di, dj]  -> (9, Cout, Cin).
    w9 = conv_w.transpose(2, 3, 0, 1).reshape(9, cout, cin).astype(jnp.float32)

    # Valid-position mask over the padded flat spatial axis (junk row/col excluded).
    pidx = jnp.arange(s, dtype=jnp.int32)
    mask = (((pidx // owp) < oh) & ((pidx % owp) < ow)).astype(jnp.float32).reshape(1, s)

    cparams = pltpu.CompilerParams(
        dimension_semantics=("parallel",),
        vmem_limit_bytes=_vmem_limit_bytes(),
    )

    # ---------------- Pass 1: conv (taps built in VMEM) + masked BN partial stats. ----
    def conv_stats_kernel(xs_ref, w_ref, mask_ref, y_ref, sum_ref, ssq_ref):
        acc = None
        for di in range(3):
            for dj in range(3):
                plane = (di & 1) * 2 + (dj & 1)          # row/col parity plane
                k = (di >> 1) * owp + (dj >> 1)          # flat-axis tap shift
                tap = xs_ref[plane, :, k:k + s]          # (Cin, S) static-offset slice
                contrib = jnp.dot(w_ref[di * 3 + dj], tap,
                                  preferred_element_type=jnp.float32,
                                  precision=precision)
                acc = contrib if acc is None else acc + contrib
        y_ref[...] = acc                                  # (Cout, S), junk cols harmless
        ym = acc * mask_ref[...]                          # zero out junk positions
        sum_ref[...] = jnp.sum(ym, axis=-1, keepdims=True)        # XLU reduction
        ssq_ref[...] = jnp.sum(ym * acc, axis=-1, keepdims=True)  # y^2 * mask

    cost1 = pl.CostEstimate(
        flops=n * s * cout * (2 * 9 * cin + 4),
        transcendentals=0,
        bytes_accessed=4 * (n * 4 * cin * sx + 9 * cout * cin + s
                            + n * cout * (s + 2)),
    )

    y3, psum, pssq = pl.pallas_call(
        conv_stats_kernel,
        grid=(n,),
        in_specs=[
            pl.BlockSpec((None, 4, cin, sx), lambda b: (b, 0, 0, 0)),
            pl.BlockSpec((9, cout, cin), lambda b: (0, 0, 0)),   # VMEM-resident weight
            pl.BlockSpec((1, s), lambda b: (0, 0)),              # VMEM-resident mask
        ],
        out_specs=[
            pl.BlockSpec((None, cout, s), lambda b: (b, 0, 0)),
            pl.BlockSpec((None, cout, 1), lambda b: (b, 0, 0)),
            pl.BlockSpec((None, cout, 1), lambda b: (b, 0, 0)),
        ],
        out_shape=(
            jax.ShapeDtypeStruct((n, cout, s), jnp.float32),
            jax.ShapeDtypeStruct((n, cout, 1), jnp.float32),
            jax.ShapeDtypeStruct((n, cout, 1), jnp.float32),
        ),
        compiler_params=cparams,
        cost_estimate=cost1,
    )(xs, w9, mask)

    # ---- Finalize GLOBAL training-mode batch stats (tiny) and fold BN into one FMA.
    count = jnp.float32(n * oh * ow)
    mean = jnp.sum(psum, axis=0).reshape(cout) / count
    ex2 = jnp.sum(pssq, axis=0).reshape(cout) / count
    var = jnp.maximum(ex2 - mean * mean, 0.0)
    scale = bn_gamma.astype(jnp.float32) * jax.lax.rsqrt(var + EPS)
    shift = bn_beta.astype(jnp.float32) - mean * scale
    scale3 = scale.reshape(cout, 1, 1)
    shift3 = shift.reshape(cout, 1, 1)

    # ---------------- Pass 2: folded BN (one FMA) + LeakyReLU, direct NCHW store. ------
    def bn_lrelu_kernel(y_ref, scale_ref, shift_ref, o_ref):
        y = y_ref[:, :oh, :ow] * scale_ref[...] + shift_ref[...]
        o_ref[...] = jnp.where(y >= 0, y, NEG_SLOPE * y)

    y4 = y3.reshape(n, cout, ohp, owp)  # free metadata reshape (trailing-dim split)

    cost2 = pl.CostEstimate(
        flops=4 * n * cout * oh * ow,
        transcendentals=0,
        bytes_accessed=4 * n * cout * (ohp * owp + oh * ow),
    )

    out = pl.pallas_call(
        bn_lrelu_kernel,
        grid=(n,),
        in_specs=[
            pl.BlockSpec((None, cout, ohp, owp), lambda b: (b, 0, 0, 0)),
            pl.BlockSpec((cout, 1, 1), lambda b: (0, 0, 0)),
            pl.BlockSpec((cout, 1, 1), lambda b: (0, 0, 0)),
        ],
        out_specs=pl.BlockSpec((None, cout, oh, ow), lambda b: (b, 0, 0, 0)),
        out_shape=jax.ShapeDtypeStruct((n, cout, oh, ow), jnp.float32),
        compiler_params=cparams,
        cost_estimate=cost2,
    )(y4, scale3, shift3)

    return out


def _reference(x, conv_w, conv_b, bn_gamma, bn_beta):
    """Pure-JAX reference of the PyTorch forward (training-mode BN)."""
    xp = jnp.pad(x, ((0, 0), (0, 0), (0, 1), (0, 1)))
    y = jax.lax.conv_general_dilated(
        xp, conv_w, window_strides=(2, 2), padding="VALID",
        dimension_numbers=("NCHW", "OIHW", "NCHW"), precision=_HIGH)
    y = y + conv_b[None, :, None, None]
    mean = jnp.mean(y, axis=(0, 2, 3), keepdims=True)
    var = jnp.mean((y - mean) ** 2, axis=(0, 2, 3), keepdims=True)
    y = (y - mean) / jnp.sqrt(var + EPS)
    y = y * bn_gamma[None, :, None, None] + bn_beta[None, :, None, None]
    return jnp.where(y >= 0, y, NEG_SLOPE * y)


if __name__ == "__main__":
    in_channels, out_channels = 4, 8
    n, h, w = 2, 16, 16

    key = jax.random.PRNGKey(0)
    kx, kw, kb, kg, kbeta = jax.random.split(key, 5)

    x = jax.random.normal(kx, (n, in_channels, h, w), dtype=jnp.float32)

    # Deterministic synthetic parameters (shapes from nn.Conv2d / nn.BatchNorm2d).
    fan_in = in_channels * 3 * 3
    bound = 1.0 / (fan_in ** 0.5)
    conv_w = jax.random.uniform(kw, (out_channels, in_channels, 3, 3),
                                dtype=jnp.float32, minval=-bound, maxval=bound)
    conv_b = jax.random.uniform(kb, (out_channels,), dtype=jnp.float32,
                                minval=-bound, maxval=bound)
    bn_gamma = 1.0 + 0.1 * jax.random.normal(kg, (out_channels,), dtype=jnp.float32)
    bn_beta = 0.1 * jax.random.normal(kbeta, (out_channels,), dtype=jnp.float32)

    out = conv_layer_gen(x, conv_w, conv_b, bn_gamma, bn_beta)
    out = jax.block_until_ready(out)

    ref = _reference(x, conv_w, conv_b, bn_gamma, bn_beta)
    assert out.shape == (n, out_channels, 8, 8), out.shape
    err = float(jnp.max(jnp.abs(out - ref)))
    assert err < 1e-4, err

    # TODO(synk): BatchNorm2d running_mean/running_var buffer updates (training-time
    # side effect) are not modeled; they do not affect the returned tensor.

    print("KERNEL_OK")
</pallas_src>

<mosaic_0001>
module attributes {stable_mosaic.version = 11 : i64} {
  func.func @conv_stats_kernel(%arg0: i32, %arg1: memref<1x4x4x128xf32, #tpu.memory_space<vmem>>, %arg2: memref<9x8x4xf32, #tpu.memory_space<vmem>>, %arg3: memref<1x81xf32, #tpu.memory_space<vmem>>, %arg4: memref<1x8x81xf32, #tpu.memory_space<vmem>>, %arg5: memref<1x8x1xf32, #tpu.memory_space<vmem>>, %arg6: memref<1x8x1xf32, #tpu.memory_space<vmem>>) attributes {dimension_semantics = [#tpu.dimension_semantics<parallel>], iteration_bounds = array<i64: 2>, scalar_prefetch = 0 : i64, scratch_operands = 0 : i64, tpu.core_type = #tpu.core_type<tc>, window_params = [{transform_indices = @transform_0, window_bounds = array<i64: 1, 4, 4, 128>}, {pipeline_mode = #tpu.pipeline_mode<synchronous>, transform_indices = @transform_1, window_bounds = array<i64: 9, 8, 4>}, {pipeline_mode = #tpu.pipeline_mode<synchronous>, transform_indices = @transform_2, window_bounds = array<i64: 1, 81>}, {transform_indices = @transform_3, window_bounds = array<i64: 1, 8, 81>}, {transform_indices = @transform_4, window_bounds = array<i64: 1, 8, 1>}, {transform_indices = @transform_5, window_bounds = array<i64: 1, 8, 1>}]} {
    %c0 = arith.constant 0 : index
    %c0_0 = arith.constant 0 : index
    %c0_1 = arith.constant 0 : index
    %c0_2 = arith.constant 0 : index
    %0 = vector.load %arg1[%c0, %c0_0, %c0_1, %c0_2] : memref<1x4x4x128xf32, #tpu.memory_space<vmem>>, vector<1x1x4x81xf32>
    %1 = vector.shape_cast %0 : vector<1x1x4x81xf32> to vector<4x81xf32>
    %c0_3 = arith.constant 0 : index
    %c0_4 = arith.constant 0 : index
    %c0_5 = arith.constant 0 : index
    %2 = vector.load %arg2[%c0_3, %c0_4, %c0_5] : memref<9x8x4xf32, #tpu.memory_space<vmem>>, vector<1x8x4xf32>
    %3 = vector.shape_cast %2 : vector<1x8x4xf32> to vector<8x4xf32>
    %cst = arith.constant dense<0.000000e+00> : vector<8x81xf32>
    %4 = tpu.matmul %3, %1, %cst {dimension_numbers = #tpu.dot_dimension_numbers<[1], [0], [0], [1], [0, 0, 1, 1], [], []>, precision = #tpu.contract_precision<fp32>} : vector<8x4xf32>, vector<4x81xf32>, vector<8x81xf32> -> vector<8x81xf32>
    %c0_6 = arith.constant 0 : index
    %c1 = arith.constant 1 : index
    %c0_7 = arith.constant 0 : index
    %c0_8 = arith.constant 0 : index
    %5 = vector.load %arg1[%c0_6, %c1, %c0_7, %c0_8] : memref<1x4x4x128xf32, #tpu.memory_space<vmem>>, vector<1x1x4x81xf32>
    %6 = vector.shape_cast %5 : vector<1x1x4x81xf32> to vector<4x81xf32>
    %c1_9 = arith.constant 1 : index
    %c0_10 = arith.constant 0 : index
    %c0_11 = arith.constant 0 : index
    %7 = vector.load %arg2[%c1_9, %c0_10, %c0_11] : memref<9x8x4xf32, #tpu.memory_space<vmem>>, vector<1x8x4xf32>
    %8 = vector.shape_cast %7 : vector<1x8x4xf32> to vector<8x4xf32>
    %cst_12 = arith.constant dense<0.000000e+00> : vector<8x81xf32>
    %9 = tpu.matmul %8, %6, %cst_12 {dimension_numbers = #tpu.dot_dimension_numbers<[1], [0], [0], [1], [0, 0, 1, 1], [], []>, precision = #tpu.contract_precision<fp32>} : vector<8x4xf32>, vector<4x81xf32>, vector<8x81xf32> -> vector<8x81xf32>
    %10 = arith.addf %4, %9 : vector<8x81xf32>
    %c0_13 = arith.constant 0 : index
    %c0_14 = arith.constant 0 : index
    %c0_15 = arith.constant 0 : index
    %c1_16 = arith.constant 1 : index
    %11 = vector.load %arg1[%c0_13, %c0_14, %c0_15, %c1_16] : memref<1x4x4x128xf32, #tpu.memory_space<vmem>>, vector<1x1x4x81xf32>
    %12 = vector.shape_cast %11 : vector<1x1x4x81xf32> to vector<4x81xf32>
    %c2 = arith.constant 2 : index
    %c0_17 = arith.constant 0 : index
    %c0_18 = arith.constant 0 : index
    %13 = vector.load %arg2[%c2, %c0_17, %c0_18] : memref<9x8x4xf32, #tpu.memory_space<vmem>>, vector<1x8x4xf32>
    %14 = vector.shape_cast %13 : vector<1x8x4xf32> to vector<8x4xf32>
    %cst_19 = arith.constant dense<0.000000e+00> : vector<8x81xf32>
    %15 = tpu.matmul %14, %12, %cst_19 {dimension_numbers = #tpu.dot_dimension_numbers<[1], [0], [0], [1], [0, 0, 1, 1], [], []>, precision = #tpu.contract_precision<fp32>} : vector<8x4xf32>, vector<4x81xf32>, vector<8x81xf32> -> vector<8x81xf32>
    %16 = arith.addf %10, %15 : vector<8x81xf32>
    %c0_20 = arith.constant 0 : index
    %c2_21 = arith.constant 2 : index
    %c0_22 = arith.constant 0 : index
    %c0_23 = arith.constant 0 : index
    %17 = vector.load %arg1[%c0_20, %c2_21, %c0_22, %c0_23] : memref<1x4x4x128xf32, #tpu.memory_space<vmem>>, vector<1x1x4x81xf32>
    %18 = vector.shape_cast %17 : vector<1x1x4x81xf32> to vector<4x81xf32>
    %c3 = arith.constant 3 : index
    %c0_24 = arith.constant 0 : index
    %c0_25 = arith.constant 0 : index
    %19 = vector.load %arg2[%c3, %c0_24, %c0_25] : memref<9x8x4xf32, #tpu.memory_space<vmem>>, vector<1x8x4xf32>
    %20 = vector.shape_cast %19 : vector<1x8x4xf32> to vector<8x4xf32>
    %cst_26 = arith.constant dense<0.000000e+00> : vector<8x81xf32>
    %21 = tpu.matmul %20, %18, %cst_26 {dimension_numbers = #tpu.dot_dimension_numbers<[1], [0], [0], [1], [0, 0, 1, 1], [], []>, precision = #tpu.contract_precision<fp32>} : vector<8x4xf32>, vector<4x81xf32>, vector<8x81xf32> -> vector<8x81xf32>
    %22 = arith.addf %16, %21 : vector<8x81xf32>
    %c0_27 = arith.constant 0 : index
    %c3_28 = arith.constant 3 : index
    %c0_29 = arith.constant 0 : index
    %c0_30 = arith.constant 0 : index
    %23 = vector.load %arg1[%c0_27, %c3_28, %c0_29, %c0_30] : memref<1x4x4x128xf32, #tpu.memory_space<vmem>>, vector<1x1x4x81xf32>
    %24 = vector.shape_cast %23 : vector<1x1x4x81xf32> to vector<4x81xf32>
    %c4 = arith.constant 4 : index
    %c0_31 = arith.constant 0 : index
    %c0_32 = arith.constant 0 : index
    %25 = vector.load %arg2[%c4, %c0_31, %c0_32] : memref<9x8x4xf32, #tpu.memory_space<vmem>>, vector<1x8x4xf32>
    %26 = vector.shape_cast %25 : vector<1x8x4xf32> to vector<8x4xf32>
    %cst_33 = arith.constant dense<0.000000e+00> : vector<8x81xf32>
    %27 = tpu.matmul %26, %24, %cst_33 {dimension_numbers = #tpu.dot_dimension_numbers<[1], [0], [0], [1], [0, 0, 1, 1], [], []>, precision = #tpu.contract_precision<fp32>} : vector<8x4xf32>, vector<4x81xf32>, vector<8x81xf32> -> vector<8x81xf32>
    %28 = arith.addf %22, %27 : vector<8x81xf32>
    %c0_34 = arith.constant 0 : index
    %c2_35 = arith.constant 2 : index
    %c0_36 = arith.constant 0 : index
    %c1_37 = arith.constant 1 : index
    %29 = vector.load %arg1[%c0_34, %c2_35, %c0_36, %c1_37] : memref<1x4x4x128xf32, #tpu.memory_space<vmem>>, vector<1x1x4x81xf32>
    %30 = vector.shape_cast %29 : vector<1x1x4x81xf32> to vector<4x81xf32>
    %c5 = arith.constant 5 : index
    %c0_38 = arith.constant 0 : index
    %c0_39 = arith.constant 0 : index
    %31 = vector.load %arg2[%c5, %c0_38, %c0_39] : memref<9x8x4xf32, #tpu.memory_space<vmem>>, vector<1x8x4xf32>
    %32 = vector.shape_cast %31 : vector<1x8x4xf32> to vector<8x4xf32>
    %cst_40 = arith.constant dense<0.000000e+00> : vector<8x81xf32>
    %33 = tpu.matmul %32, %30, %cst_40 {dimension_numbers = #tpu.dot_dimension_numbers<[1], [0], [0], [1], [0, 0, 1, 1], [], []>, precision = #tpu.contract_precision<fp32>} : vector<8x4xf32>, vector<4x81xf32>, vector<8x81xf32> -> vector<8x81xf32>
    %34 = arith.addf %28, %33 : vector<8x81xf32>
    %c0_41 = arith.constant 0 : index
    %c0_42 = arith.constant 0 : index
    %c0_43 = arith.constant 0 : index
    %c9 = arith.constant 9 : index
    %35 = vector.load %arg1[%c0_41, %c0_42, %c0_43, %c9] : memref<1x4x4x128xf32, #tpu.memory_space<vmem>>, vector<1x1x4x81xf32>
    %36 = vector.shape_cast %35 : vector<1x1x4x81xf32> to vector<4x81xf32>
    %c6 = arith.constant 6 : index
    %c0_44 = arith.constant 0 : index
    %c0_45 = arith.constant 0 : index
    %37 = vector.load %arg2[%c6, %c0_44, %c0_45] : memref<9x8x4xf32, #tpu.memory_space<vmem>>, vector<1x8x4xf32>
    %38 = vector.shape_cast %37 : vector<1x8x4xf32> to vector<8x4xf32>
    %cst_46 = arith.constant dense<0.000000e+00> : vector<8x81xf32>
    %39 = tpu.matmul %38, %36, %cst_46 {dimension_numbers = #tpu.dot_dimension_numbers<[1], [0], [0], [1], [0, 0, 1, 1], [], []>, precision = #tpu.contract_precision<fp32>} : vector<8x4xf32>, vector<4x81xf32>, vector<8x81xf32> -> vector<8x81xf32>
    %40 = arith.addf %34, %39 : vector<8x81xf32>
    %c0_47 = arith.constant 0 : index
    %c1_48 = arith.constant 1 : index
    %c0_49 = arith.constant 0 : index
    %c9_50 = arith.constant 9 : index
    %41 = vector.load %arg1[%c0_47, %c1_48, %c0_49, %c9_50] : memref<1x4x4x128xf32, #tpu.memory_space<vmem>>, vector<1x1x4x81xf32>
    %42 = vector.shape_cast %41 : vector<1x1x4x81xf32> to vector<4x81xf32>
    %c7 = arith.constant 7 : index
    %c0_51 = arith.constant 0 : index
    %c0_52 = arith.constant 0 : index
    %43 = vector.load %arg2[%c7, %c0_51, %c0_52] : memref<9x8x4xf32, #tpu.memory_space<vmem>>, vector<1x8x4xf32>
    %44 = vector.shape_cast %43 : vector<1x8x4xf32> to vector<8x4xf32>
    %cst_53 = arith.constant dense<0.000000e+00> : vector<8x81xf32>
    %45 = tpu.matmul %44, %42, %cst_53 {dimension_numbers = #tpu.dot_dimension_numbers<[1], [0], [0], [1], [0, 0, 1, 1], [], []>, precision = #tpu.contract_precision<fp32>} : vector<8x4xf32>, vector<4x81xf32>, vector<8x81xf32> -> vector<8x81xf32>
    %46 = arith.addf %40, %45 : vector<8x81xf32>
    %c0_54 = arith.constant 0 : index
    %c0_55 = arith.constant 0 : index
    %c0_56 = arith.constant 0 : index
    %c10 = arith.constant 10 : index
    %47 = vector.load %arg1[%c0_54, %c0_55, %c0_56, %c10] : memref<1x4x4x128xf32, #tpu.memory_space<vmem>>, vector<1x1x4x81xf32>
    %48 = vector.shape_cast %47 : vector<1x1x4x81xf32> to vector<4x81xf32>
    %c8 = arith.constant 8 : index
    %c0_57 = arith.constant 0 : index
    %c0_58 = arith.constant 0 : index
    %49 = vector.load %arg2[%c8, %c0_57, %c0_58] : memref<9x8x4xf32, #tpu.memory_space<vmem>>, vector<1x8x4xf32>
    %50 = vector.shape_cast %49 : vector<1x8x4xf32> to vector<8x4xf32>
    %cst_59 = arith.constant dense<0.000000e+00> : vector<8x81xf32>
    %51 = tpu.matmul %50, %48, %cst_59 {dimension_numbers = #tpu.dot_dimension_numbers<[1], [0], [0], [1], [0, 0, 1, 1], [], []>, precision = #tpu.contract_precision<fp32>} : vector<8x4xf32>, vector<4x81xf32>, vector<8x81xf32> -> vector<8x81xf32>
    %52 = arith.addf %46, %51 : vector<8x81xf32>
    %c0_60 = arith.constant 0 : index
    %c0_61 = arith.constant 0 : index
    %c0_62 = arith.constant 0 : index
    %53 = vector.load %arg4[%c0_60, %c0_61, %c0_62] : memref<1x8x81xf32, #tpu.memory_space<vmem>>, vector<1x8x81xf32>
    %54 = vector.shape_cast %53 : vector<1x8x81xf32> to vector<8x81xf32>
    %55 = vector.shape_cast %52 : vector<8x81xf32> to vector<1x8x81xf32>
    tpu.vector_store %arg4[%c0_60, %c0_61, %c0_62], %55 {strides = array<i32>} : memref<1x8x81xf32, #tpu.memory_space<vmem>>, vector<1x8x81xf32>,
    %c0_63 = arith.constant 0 : index
    %c0_64 = arith.constant 0 : index
    %56 = vector.load %arg3[%c0_63, %c0_64] : memref<1x81xf32, #tpu.memory_space<vmem>>, vector<1x81xf32>
    %57 = vector.broadcast %56 : vector<1x81xf32> to vector<8x81xf32>
    %58 = arith.mulf %52, %57 : vector<8x81xf32>
    %cst_65 = arith.constant dense<0.000000e+00> : vector<8xf32>
    %59 = vector.multi_reduction <add>, %58, %cst_65 [1] : vector<8x81xf32> to vector<8xf32>
    %60 = vector.shape_cast %59 : vector<8xf32> to vector<8x1xf32>
    %c0_66 = arith.constant 0 : index
    %c0_67 = arith.constant 0 : index
    %c0_68 = arith.constant 0 : index
    %61 = vector.load %arg5[%c0_66, %c0_67, %c0_68] : memref<1x8x1xf32, #tpu.memory_space<vmem>>, vector<1x8x1xf32>
    %62 = vector.shape_cast %61 : vector<1x8x1xf32> to vector<8x1xf32>
    %63 = vector.shape_cast %60 : vector<8x1xf32> to vector<1x8x1xf32>
    tpu.vector_store %arg5[%c0_66, %c0_67, %c0_68], %63 {strides = array<i32>} : memref<1x8x1xf32, #tpu.memory_space<vmem>>, vector<1x8x1xf32>,
    %64 = arith.mulf %58, %52 : vector<8x81xf32>
    %cst_69 = arith.constant dense<0.000000e+00> : vector<8xf32>
    %65 = vector.multi_reduction <add>, %64, %cst_69 [1] : vector<8x81xf32> to vector<8xf32>
    %66 = vector.shape_cast %65 : vector<8xf32> to vector<8x1xf32>
    %c0_70 = arith.constant 0 : index
    %c0_71 = arith.constant 0 : index
    %c0_72 = arith.constant 0 : index
    %67 = vector.load %arg6[%c0_70, %c0_71, %c0_72] : memref<1x8x1xf32, #tpu.memory_space<vmem>>, vector<1x8x1xf32>
    %68 = vector.shape_cast %67 : vector<1x8x1xf32> to vector<8x1xf32>
    %69 = vector.shape_cast %66 : vector<8x1xf32> to vector<1x8x1xf32>
    tpu.vector_store %arg6[%c0_70, %c0_71, %c0_72], %69 {strides = array<i32>} : memref<1x8x1xf32, #tpu.memory_space<vmem>>, vector<1x8x1xf32>,
    return
  }
  func.func @transform_0(%arg0: i32) -> (i32, i32, i32, i32) {
    %c0_i32 = arith.constant 0 : i32
    %c0_i32_0 = arith.constant 0 : i32
    %c0_i32_1 = arith.constant 0 : i32
    %c0_i32_2 = arith.constant 0 : i32
    return %arg0, %c0_i32, %c0_i32_0, %c0_i32_1 : i32, i32, i32, i32
  }
  func.func @transform_1(%arg0: i32) -> (i32, i32, i32) {
    %c0_i32 = arith.constant 0 : i32
    %c0_i32_0 = arith.constant 0 : i32
    %c0_i32_1 = arith.constant 0 : i32
    %c0_i32_2 = arith.constant 0 : i32
    return %c0_i32, %c0_i32_0, %c0_i32_1 : i32, i32, i32
  }
  func.func @transform_2(%arg0: i32) -> (i32, i32) {
    %c0_i32 = arith.constant 0 : i32
    %c0_i32_0 = arith.constant 0 : i32
    %c0_i32_1 = arith.constant 0 : i32
    return %c0_i32, %c0_i32_0 : i32, i32
  }
  func.func @transform_3(%arg0: i32) -> (i32, i32, i32) {
    %c0_i32 = arith.constant 0 : i32
    %c0_i32_0 = arith.constant 0 : i32
    %c0_i32_1 = arith.constant 0 : i32
    return %arg0, %c0_i32, %c0_i32_0 : i32, i32, i32
  }
  func.func @transform_4(%arg0: i32) -> (i32, i32, i32) {
    %c0_i32 = arith.constant 0 : i32
    %c0_i32_0 = arith.constant 0 : i32
    %c0_i32_1 = arith.constant 0 : i32
    return %arg0, %c0_i32, %c0_i32_0 : i32, i32, i32
  }
  func.func @transform_5(%arg0: i32) -> (i32, i32, i32) {
    %c0_i32 = arith.constant 0 : i32
    %c0_i32_0 = arith.constant 0 : i32
    %c0_i32_1 = arith.constant 0 : i32
    return %arg0, %c0_i32, %c0_i32_0 : i32, i32, i32
  }
}

</mosaic_0001>

<llo_original>
// kernel: tpu_custom_call.1
$region0: #{tpu_custom_call.1}
  #allocation0 [shape = 'u32[]', space=smem, size = 0x4, offset = 0x4, fixed_abs, tag = 'smem constant byte address 0x4 - core index']
  #allocation1 [shape = 'u32[72,128]{1,0:T(1,128)}', space=vmem, size = 0x9000, scoped, tag = 'internal scratch']
  %s0 = inlined_call_operand.vmem [shape: f32[2,4,4,128], index: 0, kind: input, shape index: {}]
  %s1 = inlined_call_operand.vmem [shape: f32[9,8,4], index: 1, kind: input, shape index: {}]
  %s2 = inlined_call_operand.vmem [shape: f32[1,81], index: 2, kind: input, shape index: {}]
  %s3 = inlined_call_operand.hbm [shape: f32[2,8,81], index: 3, kind: output, shape index: {0}]
  %s4 = inlined_call_operand.vmem [shape: f32[2,8,1], index: 4, kind: output, shape index: {1}]
  %s5 = inlined_call_operand.vmem [shape: f32[2,8,1], index: 5, kind: output, shape index: {2}]
  %6 = xla_tuple %s3, %s4, %s5
  %s7 = sld [smem:[#allocation0]]
  $region61: #{tpu_custom_call.1} parent=0
    _
  %s9 = ssub.s32 1, %s7
  %s10 = scalar_select 0, %s9, %s7
  $region1: #{tpu_custom_call.1} parent=0
    #allocation2 [shape = 'u8[8192]{0}', space=vmem, size = 0x2000, scoped, tag = 'output window, operand 0']
    #allocation3 [shape = 's32[2]{0}', space=sflag, size = 0x8, scoped, tag = 'scoped memory for tpu_custom_call.1']
    %11 = vsyncpa [#allocation3], 0
    %s12 = scalar_lea.sflag [#allocation3], 1
    %13 = vsyncpa %s12, 0
    loop: start=0, step=1, limit=4
    $region2: #{tpu_custom_call.1} parent=1 // loop_pre_header
      _
    $region3: #{tpu_custom_call.1} parent=1 // loop_header
      %s15 = sphi 0, %s19
      %p16 = scmp.ge.s32.totalorder %s15, 4
      %s25 = sphi 0, %s27
      %s28 = sphi 0, %s25
      %s29 = sphi 0, %s28
      %s45 = sphi 0, %s29
      %s49 = sphi 0, %s49
      %s51 = sphi 0, %s49
      %s52 = sphi 0, %s51
      %s66 = sphi 0, %s52
      %s70 = sphi 0, %s70
      %s72 = sphi 0, %s70
      %s73 = sphi 0, %s72
      %s87 = sphi 0, %s73
      %s93 = sphi 0, %s95
      %s96 = sphi 0, %s93
      %s97 = sphi 0, %s96
      %s113 = sphi 0, %s97
      %s119 = sphi 0, %s121
      %s122 = sphi 0, %s119
      %s123 = sphi 0, %s122
      %s139 = sphi 0, %s123
      %s145 = sphi 0, %s147
      %s148 = sphi 0, %s145
      %s149 = sphi 0, %s148
      %s165 = sphi 0, %s149
    $region4: #{tpu_custom_call.1} parent=1 // loop_header_branch
      %18 = sbr.rel (%p16) target = $region8
    $region5: #{tpu_custom_call.1} parent=1 // loop_body
      %s20 = ssub.s32 %s15, 1
      %s21 = ssub.s32 %s15, 2
      %s22 = sadd.s32 %s15, 1
      %s23 = ssub.s32 %s15, %s22
      %p24 = scmp.eq.s32.totalorder %s23, 0
      %s26 = sadd.s32 %s25, 1
      %s27 = scalar_select %p24, %s25, %s26
      %p30 = pneg %p24
      %p31 = scmp.eq.s32.totalorder %s15, 1
      %p32 = por %p30, %p31
      %p33 = scmp.ne.s32.totalorder %s25, %s28
      %p34 = scmp.eq.s32.totalorder %s15, 0
      %p35 = por %p33, %p34
      %p36 = scmp.ne.s32.totalorder %s25, %s28
      %p37 = scmp.eq.s32.totalorder %s20, 1
      %p38 = por %p36, %p37
      %p39 = scmp.ne.s32.totalorder %s28, %s29
      %p40 = scmp.eq.s32.totalorder %s20, 0
      %p41 = por %p39, %p40
      %p42 = scmp.ne.s32.totalorder %s28, %s29
      %p43 = scmp.eq.s32.totalorder %s21, 1
      %p44 = por %p42, %p43
      %p46 = scmp.ne.s32.totalorder %s29, %s45
      %p47 = scmp.eq.s32.totalorder %s21, 0
      %p48 = por %p46, %p47
      %s50 = sadd.s32 %s49, 1
      %p53 = scmp.eq.s32.totalorder %s15, 1
      %p54 = scmp.ne.s32.totalorder %s49, %s51
      %p55 = scmp.eq.s32.totalorder %s15, 0
      %p56 = por %p54, %p55
      %p57 = scmp.ne.s32.totalorder %s49, %s51
      %p58 = scmp.eq.s32.totalorder %s20, 1
      %p59 = por %p57, %p58
      %p60 = scmp.ne.s32.totalorder %s51, %s52
      %p61 = scmp.eq.s32.totalorder %s20, 0
      %p62 = por %p60, %p61
      %p63 = scmp.ne.s32.totalorder %s51, %s52
      %p64 = scmp.eq.s32.totalorder %s21, 1
      %p65 = por %p63, %p64
      %p67 = scmp.ne.s32.totalorder %s52, %s66
      %p68 = scmp.eq.s32.totalorder %s21, 0
      %p69 = por %p67, %p68
      %s71 = sadd.s32 %s70, 1
      %p74 = scmp.eq.s32.totalorder %s15, 1
      %p75 = scmp.ne.s32.totalorder %s70, %s72
      %p76 = scmp.eq.s32.totalorder %s15, 0
      %p77 = por %p75, %p76
      %p78 = scmp.ne.s32.totalorder %s70, %s72
      %p79 = scmp.eq.s32.totalorder %s20, 1
      %p80 = por %p78, %p79
      %p81 = scmp.ne.s32.totalorder %s72, %s73
      %p82 = scmp.eq.s32.totalorder %s20, 0
      %p83 = por %p81, %p82
      %p84 = scmp.ne.s32.totalorder %s72, %s73
      %p85 = scmp.eq.s32.totalorder %s21, 1
      %p86 = por %p84, %p85
      %p88 = scmp.ne.s32.totalorder %s73, %s87
      %p89 = scmp.eq.s32.totalorder %s21, 0
      %p90 = por %p88, %p89
      %s91 = ssub.s32 %s15, %s22
      %p92 = scmp.eq.s32.totalorder %s91, 0
      %s94 = sadd.s32 %s93, 1
      %s95 = scalar_select %p92, %s93, %s94
      %p98 = pneg %p92
      %p99 = scmp.eq.s32.totalorder %s15, 1
      %p100 = por %p98, %p99
      %p101 = scmp.ne.s32.totalorder %s93, %s96
      %p102 = scmp.eq.s32.totalorder %s15, 0
      %p103 = por %p101, %p102
      %p104 = scmp.ne.s32.totalorder %s93, %s96
      %p105 = scmp.eq.s32.totalorder %s20, 1
      %p106 = por %p104, %p105
      %p107 = scmp.ne.s32.totalorder %s96, %s97
      %p108 = scmp.eq.s32.totalorder %s20, 0
      %p109 = por %p107, %p108
      %p110 = scmp.ne.s32.totalorder %s96, %s97
      %p111 = scmp.eq.s32.totalorder %s21, 1
      %p112 = por %p110, %p111
      %p114 = scmp.ne.s32.totalorder %s97, %s113
      %p115 = scmp.eq.s32.totalorder %s21, 0
      %p116 = por %p114, %p115
      %s117 = ssub.s32 %s15, %s22
      %p118 = scmp.eq.s32.totalorder %s117, 0
      %s120 = sadd.s32 %s119, 1
      %s121 = scalar_select %p118, %s119, %s120
      %p124 = pneg %p118
      %p125 = scmp.eq.s32.totalorder %s15, 1
      %p126 = por %p124, %p125
      %p127 = scmp.ne.s32.totalorder %s119, %s122
      %p128 = scmp.eq.s32.totalorder %s15, 0
      %p129 = por %p127, %p128
      %p130 = scmp.ne.s32.totalorder %s119, %s122
      %p131 = scmp.eq.s32.totalorder %s20, 1
      %p132 = por %p130, %p131
      %p133 = scmp.ne.s32.totalorder %s122, %s123
      %p134 = scmp.eq.s32.totalorder %s20, 0
      %p135 = por %p133, %p134
      %p136 = scmp.ne.s32.totalorder %s122, %s123
      %p137 = scmp.eq.s32.totalorder %s21, 1
      %p138 = por %p136, %p137
      %p140 = scmp.ne.s32.totalorder %s123, %s139
      %p141 = scmp.eq.s32.totalorder %s21, 0
      %p142 = por %p140, %p141
      %s143 = ssub.s32 %s15, %s22
      %p144 = scmp.eq.s32.totalorder %s143, 0
      %s146 = sadd.s32 %s145, 1
      %s147 = scalar_select %p144, %s145, %s146
      %p150 = pneg %p144
      %p151 = scmp.eq.s32.totalorder %s15, 1
      %p152 = por %p150, %p151
      %p153 = scmp.ne.s32.totalorder %s145, %s148
      %p154 = scmp.eq.s32.totalorder %s15, 0
      %p155 = por %p153, %p154
      %p156 = scmp.ne.s32.totalorder %s145, %s148
      %p157 = scmp.eq.s32.totalorder %s20, 1
      %p158 = por %p156, %p157
      %p159 = scmp.ne.s32.totalorder %s148, %s149
      %p160 = scmp.eq.s32.totalorder %s20, 0
      %p161 = por %p159, %p160
      %p162 = scmp.ne.s32.totalorder %s148, %s149
      %p163 = scmp.eq.s32.totalorder %s21, 1
      %p164 = por %p162, %p163
      %p166 = scmp.ne.s32.totalorder %s149, %s165
      %p167 = scmp.eq.s32.totalorder %s21, 0
      %p168 = por %p166, %p167
      %p169 = scmp.le.s32.totalorder 1, %s15
      %p170 = scmp.lt.s32.totalorder %s15, 3
      %p171 = pnand %p169, %p170
      %p172 = pneg %p171
      // Predicated region
      $region9: #{tpu_custom_call.1} parent=5 // pred_check
        _
      $region10: #{tpu_custom_call.1} parent=5 // pred_check_branch
        %174 = sbr.rel (%p171) target = $region12
      $region11: #{tpu_custom_call.1} parent=5 // pred_region
        %s175 = ssub.s32 %s15, 1
        // Predicated region
        $region13: #{tpu_custom_call.1} parent=11 // pred_check
          %p176 = pneg %p62
        $region14: #{tpu_custom_call.1} parent=11 // pred_check_branch
          %178 = sbr.rel (%p176) target = $region16
        $region15: #{tpu_custom_call.1} parent=11 // pred_region
          _
        $region16: #{tpu_custom_call.1} parent=11 // pred_fallthru
          _
        // Predicated region
        $region17: #{tpu_custom_call.1} parent=11 // pred_check
          %p179 = pneg %p83
        $region18: #{tpu_custom_call.1} parent=11 // pred_check_branch
          %181 = sbr.rel (%p179) target = $region20
        $region19: #{tpu_custom_call.1} parent=11 // pred_region
          _
        $region20: #{tpu_custom_call.1} parent=11 // pred_fallthru
          _
      $region12: #{tpu_custom_call.1} parent=5 // pred_fallthru
        _
      %p182 = scmp.lt.s32.totalorder %s15, 2
      // Predicated region
      $region21: #{tpu_custom_call.1} parent=5 // pred_check
        %p183 = pneg %p182
      $region22: #{tpu_custom_call.1} parent=5 // pred_check_branch
        %185 = sbr.rel (%p183) target = $region24
      $region23: #{tpu_custom_call.1} parent=5 // pred_region
        // Predicated region
        $region25: #{tpu_custom_call.1} parent=23 // pred_check
          %p186 = pneg %p35
        $region26: #{tpu_custom_call.1} parent=23 // pred_check_branch
          %188 = sbr.rel (%p186) target = $region28
        $region27: #{tpu_custom_call.1} parent=23 // pred_region
          %p189 = scmp.lt.s32.totalorder %s15, 1
          %s190 = scalar_select %p189, %s15, 1
          %s191 = smul.addr %s190, 4
          %s192 = smul.addr %s191, 4
          %s193 = scalar_lea.vmem %s0, %s192
        $region28: #{tpu_custom_call.1} parent=23 // pred_fallthru
          _
      $region24: #{tpu_custom_call.1} parent=5 // pred_fallthru
        _
      %p194 = scmp.le.s32.totalorder 1, %s15
      %p195 = scmp.lt.s32.totalorder %s15, 3
      %p196 = pnand %p194, %p195
      %p197 = pneg %p196
      // Predicated region
      $region29: #{tpu_custom_call.1} parent=5 // pred_check
        _
      $region30: #{tpu_custom_call.1} parent=5 // pred_check_branch
        %199 = sbr.rel (%p196) target = $region32
      $region31: #{tpu_custom_call.1} parent=5 // pred_region
        %s200 = ssub.s32 %s15, 1
        %p201 = scmp.lt.s32.totalorder %s20, 1
        %s202 = scalar_select %p201, %s20, 1
        %s203 = smul.addr %s202, 4
        %s204 = smul.addr %s203, 4
        %s205 = scalar_lea.vmem %s0, %s204
        %p206 = pneg %p41
        %p207 = pneg %p38
        %p208 = pneg %p62
        %p209 = pneg %p59
        %p210 = pneg %p83
        %p211 = pneg %p80
        %p212 = pneg %p109
        %p213 = pneg %p106
        %s214 = sand.u32 %s96, 1
        %s215 = scalar_lea.sflag [#allocation3], %s214
        %s216 = sand.u32 %s96, 1
        %s217 = smul.addr %s216, 8
        %s218 = scalar_lea.vmem [#allocation2], %s217
        %p219 = pneg %p135
        %p220 = pneg %p132
        %p221 = scmp.lt.s32.totalorder %s20, 1
        %s222 = scalar_select %p221, %s20, 1
        %s223 = smul.addr %s222, 8
        %s224 = scalar_lea.vmem %s4, %s223
        %p225 = pneg %p161
        %p226 = pneg %p158
        %p227 = scmp.lt.s32.totalorder %s20, 1
        %s228 = scalar_select %p227, %s20, 1
        %s229 = smul.addr %s228, 8
        %s230 = scalar_lea.vmem %s5, %s229
        %p231 = scmp.lt.s32.totalorder %s20, 1
        %s232 = scalar_select %p231, %s20, 1
        %s233 = smul.addr %s232, 4
        %s234 = smul.addr %s233, 4
        %s235 = scalar_lea.vmem %s0, %s234
        %p236 = scmp.lt.s32.totalorder %s20, 1
        %s237 = scalar_select %p236, %s20, 1
        %s238 = smul.addr %s237, 8
        %s239 = scalar_lea.vmem %s4, %s238
        %p240 = scmp.lt.s32.totalorder %s20, 1
        %s241 = scalar_select %p240, %s20, 1
        %s242 = smul.addr %s241, 8
        %s243 = scalar_lea.vmem %s5, %s242
        %v244 = vld [vmem:[%s235] sm:$0xf]
        %v245 = vld [vmem:[%s1] sm:$0xff]
        %s246 = scalar_lea.vmem %s235, 4
        %v247 = vld [vmem:[%s246] sm:$0xf]
        %s248 = scalar_lea.vmem %s1, 8
        %v249 = vld [vmem:[%s248] sm:$0xff]
        %vm250 = vcmask 31744
        %v252 = vsel %vm250, %v249, 0
        %vm254 = vcmask 1043456
        %v256 = vsel %vm254, %v247, 0
        %258 = vmatpush.msra.mxu0 0.0
        %259 = vmatpush.msra.mxu0 0.0
        %260 = vmatpush.msra.mxu0 0.0
        %261 = vmatpush.msra.mxu0 0.0
        %262 = vmatpush.msra.mxu0 0.0
        %263 = vmatpush.msra.mxu0 0.0
        %264 = vmatpush.msra.mxu0 0.0
        %265 = vmatpush.msra.mxu0 0.0
        %266 = vmatpush.msra.mxu0 0.0
        %267 = vmatpush.msra.mxu0 0.0
        %268 = vmatpush.msra.mxu0 0.0
        %269 = vmatpush.msra.mxu0 0.0
        %270 = vmatpush.msra.mxu0 0.0
        %271 = vmatpush.msra.mxu0 0.0
        %272 = vmatpush.msra.mxu0 0.0
        %v273 = vand.u32 %v256, 4294901760
        %274 = vmatpush.msra.mxu0 %v273
        %v275 = vand.u32 %v252, 4294901760
        %v276 = vsub.f32 %v252, %v275
        %v277 = vand.u32 %v276, 4294901760
        %v278 = vsub.f32 %v276, %v277
        %v279 = vand.u32 %v278, 4294901760
        %280 = vmatmul.f32.gmra.mxu0 %v279
        %v281 = vpop.f32.mrf.mxu0
        %v282 = vadd.f32 0.0, %v281
        %283 = vdwg.mxu0
        %284 = vmatpush.msra.mxu0 0.0
        %285 = vmatpush.msra.mxu0 0.0
        %286 = vmatpush.msra.mxu0 0.0
        %287 = vmatpush.msra.mxu0 0.0
        %288 = vmatpush.msra.mxu0 0.0
        %289 = vmatpush.msra.mxu0 0.0
        %290 = vmatpush.msra.mxu0 0.0
        %291 = vmatpush.msra.mxu0 0.0
        %292 = vmatpush.msra.mxu0 0.0
        %293 = vmatpush.msra.mxu0 0.0
        %294 = vmatpush.msra.mxu0 0.0
        %295 = vmatpush.msra.mxu0 0.0
        %296 = vmatpush.msra.mxu0 0.0
        %297 = vmatpush.msra.mxu0 0.0
        %298 = vmatpush.msra.mxu0 0.0
        %v299 = vand.u32 %v256, 4294901760
        %v300 = vsub.f32 %v256, %v299
        %v301 = vand.u32 %v300, 4294901760
        %v302 = vsub.f32 %v300, %v301
        %v303 = vand.u32 %v302, 4294901760
        %304 = vmatpush.msra.mxu0 %v303
        %v305 = vand.u32 %v252, 4294901760
        %306 = vmatmul.f32.gmra.mxu0 %v305
        %v307 = vpop.f32.mrf.mxu0
        %v308 = vadd.f32 %v282, %v307
        %309 = vdwg.mxu0
        %310 = vmatpush.msra.mxu0 0.0
        %311 = vmatpush.msra.mxu0 0.0
        %312 = vmatpush.msra.mxu0 0.0
        %313 = vmatpush.msra.mxu0 0.0
        %314 = vmatpush.msra.mxu0 0.0
        %315 = vmatpush.msra.mxu0 0.0
        %316 = vmatpush.msra.mxu0 0.0
        %317 = vmatpush.msra.mxu0 0.0
        %318 = vmatpush.msra.mxu0 0.0
        %319 = vmatpush.msra.mxu0 0.0
        %320 = vmatpush.msra.mxu0 0.0
        %321 = vmatpush.msra.mxu0 0.0
        %322 = vmatpush.msra.mxu0 0.0
        %323 = vmatpush.msra.mxu0 0.0
        %324 = vmatpush.msra.mxu0 0.0
        %v325 = vand.u32 %v256, 4294901760
        %v326 = vsub.f32 %v256, %v325
        %327 = vmatpush.msra.mxu0 %v326
        %v328 = vand.u32 %v252, 4294901760
        %v329 = vsub.f32 %v252, %v328
        %330 = vmatmul.f32.gmra.mxu0 %v329
        %v331 = vpop.f32.mrf.mxu0
        %v332 = vadd.f32 %v308, %v331
        %333 = vdwg.mxu0
        %334 = vmatpush.msra.mxu0 0.0
        %335 = vmatpush.msra.mxu0 0.0
        %336 = vmatpush.msra.mxu0 0.0
        %337 = vmatpush.msra.mxu0 0.0
        %338 = vmatpush.msra.mxu0 0.0
        %339 = vmatpush.msra.mxu0 0.0
        %340 = vmatpush.msra.mxu0 0.0
        %341 = vmatpush.msra.mxu0 0.0
        %342 = vmatpush.msra.mxu0 0.0
        %343 = vmatpush.msra.mxu0 0.0
        %344 = vmatpush.msra.mxu0 0.0
        %345 = vmatpush.msra.mxu0 0.0
        %346 = vmatpush.msra.mxu0 0.0
        %347 = vmatpush.msra.mxu0 0.0
        %348 = vmatpush.msra.mxu0 0.0
        %v349 = vand.u32 %v256, 4294901760
        %350 = vmatpush.msra.mxu0 %v349
        %v351 = vand.u32 %v252, 4294901760
        %v352 = vsub.f32 %v252, %v351
        %v353 = vand.u32 %v352, 4294901760
        %354 = vmatmul.f32.gmra.mxu0 %v353
        %v355 = vpop.f32.mrf.mxu0
        %v356 = vadd.f32 %v332, %v355
        %357 = vdwg.mxu0
        %358 = vmatpush.msra.mxu0 0.0
        %359 = vmatpush.msra.mxu0 0.0
        %360 = vmatpush.msra.mxu0 0.0
        %361 = vmatpush.msra.mxu0 0.0
        %362 = vmatpush.msra.mxu0 0.0
        %363 = vmatpush.msra.mxu0 0.0
        %364 = vmatpush.msra.mxu0 0.0
        %365 = vmatpush.msra.mxu0 0.0
        %366 = vmatpush.msra.mxu0 0.0
        %367 = vmatpush.msra.mxu0 0.0
        %368 = vmatpush.msra.mxu0 0.0
        %369 = vmatpush.msra.mxu0 0.0
        %370 = vmatpush.msra.mxu0 0.0
        %371 = vmatpush.msra.mxu0 0.0
        %372 = vmatpush.msra.mxu0 0.0
        %v373 = vand.u32 %v256, 4294901760
        %v374 = vsub.f32 %v256, %v373
        %v375 = vand.u32 %v374, 4294901760
        %376 = vmatpush.msra.mxu0 %v375
        %v377 = vand.u32 %v252, 4294901760
        %378 = vmatmul.f32.gmra.mxu0 %v377
        %v379 = vpop.f32.mrf.mxu0
        %v380 = vadd.f32 %v356, %v379
        %381 = vdwg.mxu0
        %382 = vmatpush.msra.mxu0 0.0
        %383 = vmatpush.msra.mxu0 0.0
        %384 = vmatpush.msra.mxu0 0.0
        %385 = vmatpush.msra.mxu0 0.0
        %386 = vmatpush.msra.mxu0 0.0
        %387 = vmatpush.msra.mxu0 0.0
        %388 = vmatpush.msra.mxu0 0.0
        %389 = vmatpush.msra.mxu0 0.0
        %390 = vmatpush.msra.mxu0 0.0
        %391 = vmatpush.msra.mxu0 0.0
        %392 = vmatpush.msra.mxu0 0.0
        %393 = vmatpush.msra.mxu0 0.0
        %394 = vmatpush.msra.mxu0 0.0
        %395 = vmatpush.msra.mxu0 0.0
        %396 = vmatpush.msra.mxu0 0.0
        %v397 = vand.u32 %v256, 4294901760
        %398 = vmatpush.msra.mxu0 %v397
        %v399 = vand.u32 %v252, 4294901760
        %400 = vmatmul.f32.gmra.mxu0 %v399
        %v401 = vpop.f32.mrf.mxu0
        %v402 = vadd.f32 %v380, %v401
        %403 = vdwg.mxu0
        %v405 = vsel %vm250, %v245, 0
        %v408 = vsel %vm254, %v244, 0
        %410 = vmatpush.msra.mxu0 0.0
        %411 = vmatpush.msra.mxu0 0.0
        %412 = vmatpush.msra.mxu0 0.0
        %413 = vmatpush.msra.mxu0 0.0
        %414 = vmatpush.msra.mxu0 0.0
        %415 = vmatpush.msra.mxu0 0.0
        %416 = vmatpush.msra.mxu0 0.0
        %417 = vmatpush.msra.mxu0 0.0
        %418 = vmatpush.msra.mxu0 0.0
        %419 = vmatpush.msra.mxu0 0.0
        %420 = vmatpush.msra.mxu0 0.0
        %421 = vmatpush.msra.mxu0 0.0
        %422 = vmatpush.msra.mxu0 0.0
        %423 = vmatpush.msra.mxu0 0.0
        %424 = vmatpush.msra.mxu0 0.0
        %v425 = vand.u32 %v408, 4294901760
        %426 = vmatpush.msra.mxu0 %v425
        %v427 = vand.u32 %v405, 4294901760
        %v428 = vsub.f32 %v405, %v427
        %v429 = vand.u32 %v428, 4294901760
        %v430 = vsub.f32 %v428, %v429
        %v431 = vand.u32 %v430, 4294901760
        %432 = vmatmul.f32.gmra.mxu0 %v431
        %v433 = vpop.f32.mrf.mxu0
        %v434 = vadd.f32 %v402, %v433
        %435 = vdwg.mxu0
        %436 = vmatpush.msra.mxu0 0.0
        %437 = vmatpush.msra.mxu0 0.0
        %438 = vmatpush.msra.mxu0 0.0
        %439 = vmatpush.msra.mxu0 0.0
        %440 = vmatpush.msra.mxu0 0.0
        %441 = vmatpush.msra.mxu0 0.0
        %442 = vmatpush.msra.mxu0 0.0
        %443 = vmatpush.msra.mxu0 0.0
        %444 = vmatpush.msra.mxu0 0.0
        %445 = vmatpush.msra.mxu0 0.0
        %446 = vmatpush.msra.mxu0 0.0
        %447 = vmatpush.msra.mxu0 0.0
        %448 = vmatpush.msra.mxu0 0.0
        %449 = vmatpush.msra.mxu0 0.0
        %450 = vmatpush.msra.mxu0 0.0
        %v451 = vand.u32 %v408, 4294901760
        %v452 = vsub.f32 %v408, %v451
        %v453 = vand.u32 %v452, 4294901760
        %v454 = vsub.f32 %v452, %v453
        %v455 = vand.u32 %v454, 4294901760
        %456 = vmatpush.msra.mxu0 %v455
        %v457 = vand.u32 %v405, 4294901760
        %458 = vmatmul.f32.gmra.mxu0 %v457
        %v459 = vpop.f32.mrf.mxu0
        %v460 = vadd.f32 %v434, %v459
        %461 = vdwg.mxu0
        %462 = vmatpush.msra.mxu0 0.0
        %463 = vmatpush.msra.mxu0 0.0
        %464 = vmatpush.msra.mxu0 0.0
        %465 = vmatpush.msra.mxu0 0.0
        %466 = vmatpush.msra.mxu0 0.0
        %467 = vmatpush.msra.mxu0 0.0
        %468 = vmatpush.msra.mxu0 0.0
        %469 = vmatpush.msra.mxu0 0.0
        %470 = vmatpush.msra.mxu0 0.0
        %471 = vmatpush.msra.mxu0 0.0
        %472 = vmatpush.msra.mxu0 0.0
        %473 = vmatpush.msra.mxu0 0.0
        %474 = vmatpush.msra.mxu0 0.0
        %475 = vmatpush.msra.mxu0 0.0
        %476 = vmatpush.msra.mxu0 0.0
        %v477 = vand.u32 %v408, 4294901760
        %v478 = vsub.f32 %v408, %v477
        %479 = vmatpush.msra.mxu0 %v478
        %v480 = vand.u32 %v405, 4294901760
        %v481 = vsub.f32 %v405, %v480
        %482 = vmatmul.f32.gmra.mxu0 %v481
        %v483 = vpop.f32.mrf.mxu0
        %v484 = vadd.f32 %v460, %v483
        %485 = vdwg.mxu0
        %486 = vmatpush.msra.mxu0 0.0
        %487 = vmatpush.msra.mxu0 0.0
        %488 = vmatpush.msra.mxu0 0.0
        %489 = vmatpush.msra.mxu0 0.0
        %490 = vmatpush.msra.mxu0 0.0
        %491 = vmatpush.msra.mxu0 0.0
        %492 = vmatpush.msra.mxu0 0.0
        %493 = vmatpush.msra.mxu0 0.0
        %494 = vmatpush.msra.mxu0 0.0
        %495 = vmatpush.msra.mxu0 0.0
        %496 = vmatpush.msra.mxu0 0.0
        %497 = vmatpush.msra.mxu0 0.0
        %498 = vmatpush.msra.mxu0 0.0
        %499 = vmatpush.msra.mxu0 0.0
        %500 = vmatpush.msra.mxu0 0.0
        %v501 = vand.u32 %v408, 4294901760
        %502 = vmatpush.msra.mxu0 %v501
        %v503 = vand.u32 %v405, 4294901760
        %v504 = vsub.f32 %v405, %v503
        %v505 = vand.u32 %v504, 4294901760
        %506 = vmatmul.f32.gmra.mxu0 %v505
        %v507 = vpop.f32.mrf.mxu0
        %v508 = vadd.f32 %v484, %v507
        %509 = vdwg.mxu0
        %510 = vmatpush.msra.mxu0 0.0
        %511 = vmatpush.msra.mxu0 0.0
        %512 = vmatpush.msra.mxu0 0.0
        %513 = vmatpush.msra.mxu0 0.0
        %514 = vmatpush.msra.mxu0 0.0
        %515 = vmatpush.msra.mxu0 0.0
        %516 = vmatpush.msra.mxu0 0.0
        %517 = vmatpush.msra.mxu0 0.0
        %518 = vmatpush.msra.mxu0 0.0
        %519 = vmatpush.msra.mxu0 0.0
        %520 = vmatpush.msra.mxu0 0.0
        %521 = vmatpush.msra.mxu0 0.0
        %522 = vmatpush.msra.mxu0 0.0
        %523 = vmatpush.msra.mxu0 0.0
        %524 = vmatpush.msra.mxu0 0.0
        %v525 = vand.u32 %v408, 4294901760
        %v526 = vsub.f32 %v408, %v525
        %v527 = vand.u32 %v526, 4294901760
        %528 = vmatpush.msra.mxu0 %v527
        %v529 = vand.u32 %v405, 4294901760
        %530 = vmatmul.f32.gmra.mxu0 %v529
        %v531 = vpop.f32.mrf.mxu0
        %v532 = vadd.f32 %v508, %v531
        %533 = vdwg.mxu0
        %534 = vmatpush.msra.mxu0 0.0
        %535 = vmatpush.msra.mxu0 0.0
        %536 = vmatpush.msra.mxu0 0.0
        %537 = vmatpush.msra.mxu0 0.0
        %538 = vmatpush.msra.mxu0 0.0
        %539 = vmatpush.msra.mxu0 0.0
        %540 = vmatpush.msra.mxu0 0.0
        %541 = vmatpush.msra.mxu0 0.0
        %542 = vmatpush.msra.mxu0 0.0
        %543 = vmatpush.msra.mxu0 0.0
        %544 = vmatpush.msra.mxu0 0.0
        %545 = vmatpush.msra.mxu0 0.0
        %546 = vmatpush.msra.mxu0 0.0
        %547 = vmatpush.msra.mxu0 0.0
        %548 = vmatpush.msra.mxu0 0.0
        %v549 = vand.u32 %v408, 4294901760
        %550 = vmatpush.msra.mxu0 %v549
        %v551 = vand.u32 %v405, 4294901760
        %552 = vmatmul.f32.gmra.mxu0 %v551
        %v553 = vpop.f32.mrf.mxu0
        %v554 = vadd.f32 %v532, %v553
        %555 = vdwg.mxu0
        %s556 = scalar_lea.vmem %s1, 16
        %v557 = vld [vmem:[%s556] sm:$0xff]
        %558 = vrot.lane.b32.xlu0 %v244, 127
        %v559 = vpop.permute.xlu0 %558
        %v561 = vsel %vm250, %v557, 0
        %v563 = vsel %vm254, %v559, 0
        %565 = vmatpush.msra.mxu0 0.0
        %566 = vmatpush.msra.mxu0 0.0
        %567 = vmatpush.msra.mxu0 0.0
        %568 = vmatpush.msra.mxu0 0.0
        %569 = vmatpush.msra.mxu0 0.0
        %570 = vmatpush.msra.mxu0 0.0
        %571 = vmatpush.msra.mxu0 0.0
        %572 = vmatpush.msra.mxu0 0.0
        %573 = vmatpush.msra.mxu0 0.0
        %574 = vmatpush.msra.mxu0 0.0
        %575 = vmatpush.msra.mxu0 0.0
        %576 = vmatpush.msra.mxu0 0.0
        %577 = vmatpush.msra.mxu0 0.0
        %578 = vmatpush.msra.mxu0 0.0
        %579 = vmatpush.msra.mxu0 0.0
        %v580 = vand.u32 %v563, 4294901760
        %581 = vmatpush.msra.mxu0 %v580
        %v582 = vand.u32 %v561, 4294901760
        %v583 = vsub.f32 %v561, %v582
        %v584 = vand.u32 %v583, 4294901760
        %v585 = vsub.f32 %v583, %v584
        %v586 = vand.u32 %v585, 4294901760
        %587 = vmatmul.f32.gmra.mxu0 %v586
        %v588 = vpop.f32.mrf.mxu0
        %v589 = vadd.f32 0.0, %v588
        %590 = vdwg.mxu0
        %591 = vmatpush.msra.mxu0 0.0
        %592 = vmatpush.msra.mxu0 0.0
        %593 = vmatpush.msra.mxu0 0.0
        %594 = vmatpush.msra.mxu0 0.0
        %595 = vmatpush.msra.mxu0 0.0
        %596 = vmatpush.msra.mxu0 0.0
        %597 = vmatpush.msra.mxu0 0.0
        %598 = vmatpush.msra.mxu0 0.0
        %599 = vmatpush.msra.mxu0 0.0
        %600 = vmatpush.msra.mxu0 0.0
        %601 = vmatpush.msra.mxu0 0.0
        %602 = vmatpush.msra.mxu0 0.0
        %603 = vmatpush.msra.mxu0 0.0
        %604 = vmatpush.msra.mxu0 0.0
        %605 = vmatpush.msra.mxu0 0.0
        %v606 = vand.u32 %v563, 4294901760
        %v607 = vsub.f32 %v563, %v606
        %v608 = vand.u32 %v607, 4294901760
        %v609 = vsub.f32 %v607, %v608
        %v610 = vand.u32 %v609, 4294901760
        %611 = vmatpush.msra.mxu0 %v610
        %v612 = vand.u32 %v561, 4294901760
        %613 = vmatmul.f32.gmra.mxu0 %v612
        %v614 = vpop.f32.mrf.mxu0
        %v615 = vadd.f32 %v589, %v614
        %616 = vdwg.mxu0
        %617 = vmatpush.msra.mxu0 0.0
        %618 = vmatpush.msra.mxu0 0.0
        %619 = vmatpush.msra.mxu0 0.0
        %620 = vmatpush.msra.mxu0 0.0
        %621 = vmatpush.msra.mxu0 0.0
        %622 = vmatpush.msra.mxu0 0.0
        %623 = vmatpush.msra.mxu0 0.0
        %624 = vmatpush.msra.mxu0 0.0
        %625 = vmatpush.msra.mxu0 0.0
        %626 = vmatpush.msra.mxu0 0.0
        %627 = vmatpush.msra.mxu0 0.0
        %628 = vmatpush.msra.mxu0 0.0
        %629 = vmatpush.msra.mxu0 0.0
        %630 = vmatpush.msra.mxu0 0.0
        %631 = vmatpush.msra.mxu0 0.0
        %v632 = vand.u32 %v563, 4294901760
        %v633 = vsub.f32 %v563, %v632
        %634 = vmatpush.msra.mxu0 %v633
        %v635 = vand.u32 %v561, 4294901760
        %v636 = vsub.f32 %v561, %v635
        %637 = vmatmul.f32.gmra.mxu0 %v636
        %v638 = vpop.f32.mrf.mxu0
        %v639 = vadd.f32 %v615, %v638
        %640 = vdwg.mxu0
        %641 = vmatpush.msra.mxu0 0.0
        %642 = vmatpush.msra.mxu0 0.0
        %643 = vmatpush.msra.mxu0 0.0
        %644 = vmatpush.msra.mxu0 0.0
        %645 = vmatpush.msra.mxu0 0.0
        %646 = vmatpush.msra.mxu0 0.0
        %647 = vmatpush.msra.mxu0 0.0
        %648 = vmatpush.msra.mxu0 0.0
        %649 = vmatpush.msra.mxu0 0.0
        %650 = vmatpush.msra.mxu0 0.0
        %651 = vmatpush.msra.mxu0 0.0
        %652 = vmatpush.msra.mxu0 0.0
        %653 = vmatpush.msra.mxu0 0.0
        %654 = vmatpush.msra.mxu0 0.0
        %655 = vmatpush.msra.mxu0 0.0
        %v656 = vand.u32 %v563, 4294901760
        %657 = vmatpush.msra.mxu0 %v656
        %v658 = vand.u32 %v561, 4294901760
        %v659 = vsub.f32 %v561, %v658
        %v660 = vand.u32 %v659, 4294901760
        %661 = vmatmul.f32.gmra.mxu0 %v660
        %v662 = vpop.f32.mrf.mxu0
        %v663 = vadd.f32 %v639, %v662
        %664 = vdwg.mxu0
        %665 = vmatpush.msra.mxu0 0.0
        %666 = vmatpush.msra.mxu0 0.0
        %667 = vmatpush.msra.mxu0 0.0
        %668 = vmatpush.msra.mxu0 0.0
        %669 = vmatpush.msra.mxu0 0.0
        %670 = vmatpush.msra.mxu0 0.0
        %671 = vmatpush.msra.mxu0 0.0
        %672 = vmatpush.msra.mxu0 0.0
        %673 = vmatpush.msra.mxu0 0.0
        %674 = vmatpush.msra.mxu0 0.0
        %675 = vmatpush.msra.mxu0 0.0
        %676 = vmatpush.msra.mxu0 0.0
        %677 = vmatpush.msra.mxu0 0.0
        %678 = vmatpush.msra.mxu0 0.0
        %679 = vmatpush.msra.mxu0 0.0
        %v680 = vand.u32 %v563, 4294901760
        %v681 = vsub.f32 %v563, %v680
        %v682 = vand.u32 %v681, 4294901760
        %683 = vmatpush.msra.mxu0 %v682
        %v684 = vand.u32 %v561, 4294901760
        %685 = vmatmul.f32.gmra.mxu0 %v684
        %v686 = vpop.f32.mrf.mxu0
        %v687 = vadd.f32 %v663, %v686
        %688 = vdwg.mxu0
        %689 = vmatpush.msra.mxu0 0.0
        %690 = vmatpush.msra.mxu0 0.0
        %691 = vmatpush.msra.mxu0 0.0
        %692 = vmatpush.msra.mxu0 0.0
        %693 = vmatpush.msra.mxu0 0.0
        %694 = vmatpush.msra.mxu0 0.0
        %695 = vmatpush.msra.mxu0 0.0
        %696 = vmatpush.msra.mxu0 0.0
        %697 = vmatpush.msra.mxu0 0.0
        %698 = vmatpush.msra.mxu0 0.0
        %699 = vmatpush.msra.mxu0 0.0
        %700 = vmatpush.msra.mxu0 0.0
        %701 = vmatpush.msra.mxu0 0.0
        %702 = vmatpush.msra.mxu0 0.0
        %703 = vmatpush.msra.mxu0 0.0
        %v704 = vand.u32 %v563, 4294901760
        %705 = vmatpush.msra.mxu0 %v704
        %v706 = vand.u32 %v561, 4294901760
        %707 = vmatmul.f32.gmra.mxu0 %v706
        %v708 = vpop.f32.mrf.mxu0
        %v709 = vadd.f32 %v687, %v708
        %710 = vdwg.mxu0
        %v711 = vadd.f32 %v554, %v709
        %s712 = scalar_lea.vmem %s235, 8
        %v713 = vld [vmem:[%s712] sm:$0xf]
        %s714 = scalar_lea.vmem %s1, 24
        %v715 = vld [vmem:[%s714] sm:$0xff]
        %v717 = vsel %vm250, %v715, 0
        %v720 = vsel %vm254, %v713, 0
        %722 = vmatpush.msra.mxu0 0.0
        %723 = vmatpush.msra.mxu0 0.0
        %724 = vmatpush.msra.mxu0 0.0
        %725 = vmatpush.msra.mxu0 0.0
        %726 = vmatpush.msra.mxu0 0.0
        %727 = vmatpush.msra.mxu0 0.0
        %728 = vmatpush.msra.mxu0 0.0
        %729 = vmatpush.msra.mxu0 0.0
        %730 = vmatpush.msra.mxu0 0.0
        %731 = vmatpush.msra.mxu0 0.0
        %732 = vmatpush.msra.mxu0 0.0
        %733 = vmatpush.msra.mxu0 0.0
        %734 = vmatpush.msra.mxu0 0.0
        %735 = vmatpush.msra.mxu0 0.0
        %736 = vmatpush.msra.mxu0 0.0
        %v737 = vand.u32 %v720, 4294901760
        %738 = vmatpush.msra.mxu0 %v737
        %v739 = vand.u32 %v717, 4294901760
        %v740 = vsub.f32 %v717, %v739
        %v741 = vand.u32 %v740, 4294901760
        %v742 = vsub.f32 %v740, %v741
        %v743 = vand.u32 %v742, 4294901760
        %744 = vmatmul.f32.gmra.mxu0 %v743
        %v745 = vpop.f32.mrf.mxu0
        %v746 = vadd.f32 0.0, %v745
        %747 = vdwg.mxu0
        %748 = vmatpush.msra.mxu0 0.0
        %749 = vmatpush.msra.mxu0 0.0
        %750 = vmatpush.msra.mxu0 0.0
        %751 = vmatpush.msra.mxu0 0.0
        %752 = vmatpush.msra.mxu0 0.0
        %753 = vmatpush.msra.mxu0 0.0
        %754 = vmatpush.msra.mxu0 0.0
        %755 = vmatpush.msra.mxu0 0.0
        %756 = vmatpush.msra.mxu0 0.0
        %757 = vmatpush.msra.mxu0 0.0
        %758 = vmatpush.msra.mxu0 0.0
        %759 = vmatpush.msra.mxu0 0.0
        %760 = vmatpush.msra.mxu0 0.0
        %761 = vmatpush.msra.mxu0 0.0
        %762 = vmatpush.msra.mxu0 0.0
        %v763 = vand.u32 %v720, 4294901760
        %v764 = vsub.f32 %v720, %v763
        %v765 = vand.u32 %v764, 4294901760
        %v766 = vsub.f32 %v764, %v765
        %v767 = vand.u32 %v766, 4294901760
        %768 = vmatpush.msra.mxu0 %v767
        %v769 = vand.u32 %v717, 4294901760
        %770 = vmatmul.f32.gmra.mxu0 %v769
        %v771 = vpop.f32.mrf.mxu0
        %v772 = vadd.f32 %v746, %v771
        %773 = vdwg.mxu0
        %774 = vmatpush.msra.mxu0 0.0
        %775 = vmatpush.msra.mxu0 0.0
        %776 = vmatpush.msra.mxu0 0.0
        %777 = vmatpush.msra.mxu0 0.0
        %778 = vmatpush.msra.mxu0 0.0
        %779 = vmatpush.msra.mxu0 0.0
        %780 = vmatpush.msra.mxu0 0.0
        %781 = vmatpush.msra.mxu0 0.0
        %782 = vmatpush.msra.mxu0 0.0
        %783 = vmatpush.msra.mxu0 0.0
        %784 = vmatpush.msra.mxu0 0.0
        %785 = vmatpush.msra.mxu0 0.0
        %786 = vmatpush.msra.mxu0 0.0
        %787 = vmatpush.msra.mxu0 0.0
        %788 = vmatpush.msra.mxu0 0.0
        %v789 = vand.u32 %v720, 4294901760
        %v790 = vsub.f32 %v720, %v789
        %791 = vmatpush.msra.mxu0 %v790
        %v792 = vand.u32 %v717, 4294901760
        %v793 = vsub.f32 %v717, %v792
        %794 = vmatmul.f32.gmra.mxu0 %v793
        %v795 = vpop.f32.mrf.mxu0
        %v796 = vadd.f32 %v772, %v795
        %797 = vdwg.mxu0
        %798 = vmatpush.msra.mxu0 0.0
        %799 = vmatpush.msra.mxu0 0.0
        %800 = vmatpush.msra.mxu0 0.0
        %801 = vmatpush.msra.mxu0 0.0
        %802 = vmatpush.msra.mxu0 0.0
        %803 = vmatpush.msra.mxu0 0.0
        %804 = vmatpush.msra.mxu0 0.0
        %805 = vmatpush.msra.mxu0 0.0
        %806 = vmatpush.msra.mxu0 0.0
        %807 = vmatpush.msra.mxu0 0.0
        %808 = vmatpush.msra.mxu0 0.0
        %809 = vmatpush.msra.mxu0 0.0
        %810 = vmatpush.msra.mxu0 0.0
        %811 = vmatpush.msra.mxu0 0.0
        %812 = vmatpush.msra.mxu0 0.0
        %v813 = vand.u32 %v720, 4294901760
        %814 = vmatpush.msra.mxu0 %v813
        %v815 = vand.u32 %v717, 4294901760
        %v816 = vsub.f32 %v717, %v815
        %v817 = vand.u32 %v816, 4294901760
        %818 = vmatmul.f32.gmra.mxu0 %v817
        %v819 = vpop.f32.mrf.mxu0
        %v820 = vadd.f32 %v796, %v819
        %821 = vdwg.mxu0
        %822 = vmatpush.msra.mxu0 0.0
        %823 = vmatpush.msra.mxu0 0.0
        %824 = vmatpush.msra.mxu0 0.0
        %825 = vmatpush.msra.mxu0 0.0
        %826 = vmatpush.msra.mxu0 0.0
        %827 = vmatpush.msra.mxu0 0.0
        %828 = vmatpush.msra.mxu0 0.0
        %829 = vmatpush.msra.mxu0 0.0
        %830 = vmatpush.msra.mxu0 0.0
        %831 = vmatpush.msra.mxu0 0.0
        %832 = vmatpush.msra.mxu0 0.0
        %833 = vmatpush.msra.mxu0 0.0
        %834 = vmatpush.msra.mxu0 0.0
        %835 = vmatpush.msra.mxu0 0.0
        %836 = vmatpush.msra.mxu0 0.0
        %v837 = vand.u32 %v720, 4294901760
        %v838 = vsub.f32 %v720, %v837
        %v839 = vand.u32 %v838, 4294901760
        %840 = vmatpush.msra.mxu0 %v839
        %v841 = vand.u32 %v717, 4294901760
        %842 = vmatmul.f32.gmra.mxu0 %v841
        %v843 = vpop.f32.mrf.mxu0
        %v844 = vadd.f32 %v820, %v843
        %845 = vdwg.mxu0
        %846 = vmatpush.msra.mxu0 0.0
        %847 = vmatpush.msra.mxu0 0.0
        %848 = vmatpush.msra.mxu0 0.0
        %849 = vmatpush.msra.mxu0 0.0
        %850 = vmatpush.msra.mxu0 0.0
        %851 = vmatpush.msra.mxu0 0.0
        %852 = vmatpush.msra.mxu0 0.0
        %853 = vmatpush.msra.mxu0 0.0
        %854 = vmatpush.msra.mxu0 0.0
        %855 = vmatpush.msra.mxu0 0.0
        %856 = vmatpush.msra.mxu0 0.0
        %857 = vmatpush.msra.mxu0 0.0
        %858 = vmatpush.msra.mxu0 0.0
        %859 = vmatpush.msra.mxu0 0.0
        %860 = vmatpush.msra.mxu0 0.0
        %v861 = vand.u32 %v720, 4294901760
        %862 = vmatpush.msra.mxu0 %v861
        %v863 = vand.u32 %v717, 4294901760
        %864 = vmatmul.f32.gmra.mxu0 %v863
        %v865 = vpop.f32.mrf.mxu0
        %v866 = vadd.f32 %v844, %v865
        %867 = vdwg.mxu0
        %v868 = vadd.f32 %v711, %v866
        %s869 = scalar_lea.vmem %s235, 12
        %v870 = vld [vmem:[%s869] sm:$0xf]
        %s871 = scalar_lea.vmem %s1, 32
        %v872 = vld [vmem:[%s871] sm:$0xff]
        %v874 = vsel %vm250, %v872, 0
        %v877 = vsel %vm254, %v870, 0
        %879 = vmatpush.msra.mxu0 0.0
        %880 = vmatpush.msra.mxu0 0.0
        %881 = vmatpush.msra.mxu0 0.0
        %882 = vmatpush.msra.mxu0 0.0
        %883 = vmatpush.msra.mxu0 0.0
        %884 = vmatpush.msra.mxu0 0.0
        %885 = vmatpush.msra.mxu0 0.0
        %886 = vmatpush.msra.mxu0 0.0
        %887 = vmatpush.msra.mxu0 0.0
        %888 = vmatpush.msra.mxu0 0.0
        %889 = vmatpush.msra.mxu0 0.0
        %890 = vmatpush.msra.mxu0 0.0
        %891 = vmatpush.msra.mxu0 0.0
        %892 = vmatpush.msra.mxu0 0.0
        %893 = vmatpush.msra.mxu0 0.0
        %v894 = vand.u32 %v877, 4294901760
        %895 = vmatpush.msra.mxu0 %v894
        %v896 = vand.u32 %v874, 4294901760
        %v897 = vsub.f32 %v874, %v896
        %v898 = vand.u32 %v897, 4294901760
        %v899 = vsub.f32 %v897, %v898
        %v900 = vand.u32 %v899, 4294901760
        %901 = vmatmul.f32.gmra.mxu0 %v900
        %v902 = vpop.f32.mrf.mxu0
        %v903 = vadd.f32 0.0, %v902
        %904 = vdwg.mxu0
        %905 = vmatpush.msra.mxu0 0.0
        %906 = vmatpush.msra.mxu0 0.0
        %907 = vmatpush.msra.mxu0 0.0
        %908 = vmatpush.msra.mxu0 0.0
        %909 = vmatpush.msra.mxu0 0.0
        %910 = vmatpush.msra.mxu0 0.0
        %911 = vmatpush.msra.mxu0 0.0
        %912 = vmatpush.msra.mxu0 0.0
        %913 = vmatpush.msra.mxu0 0.0
        %914 = vmatpush.msra.mxu0 0.0
        %915 = vmatpush.msra.mxu0 0.0
        %916 = vmatpush.msra.mxu0 0.0
        %917 = vmatpush.msra.mxu0 0.0
        %918 = vmatpush.msra.mxu0 0.0
        %919 = vmatpush.msra.mxu0 0.0
        %v920 = vand.u32 %v877, 4294901760
        %v921 = vsub.f32 %v877, %v920
        %v922 = vand.u32 %v921, 4294901760
        %v923 = vsub.f32 %v921, %v922
        %v924 = vand.u32 %v923, 4294901760
        %925 = vmatpush.msra.mxu0 %v924
        %v926 = vand.u32 %v874, 4294901760
        %927 = vmatmul.f32.gmra.mxu0 %v926
        %v928 = vpop.f32.mrf.mxu0
        %v929 = vadd.f32 %v903, %v928
        %930 = vdwg.mxu0
        %931 = vmatpush.msra.mxu0 0.0
        %932 = vmatpush.msra.mxu0 0.0
        %933 = vmatpush.msra.mxu0 0.0
        %934 = vmatpush.msra.mxu0 0.0
        %935 = vmatpush.msra.mxu0 0.0
        %936 = vmatpush.msra.mxu0 0.0
        %937 = vmatpush.msra.mxu0 0.0
        %938 = vmatpush.msra.mxu0 0.0
        %939 = vmatpush.msra.mxu0 0.0
        %940 = vmatpush.msra.mxu0 0.0
        %941 = vmatpush.msra.mxu0 0.0
        %942 = vmatpush.msra.mxu0 0.0
        %943 = vmatpush.msra.mxu0 0.0
        %944 = vmatpush.msra.mxu0 0.0
        %945 = vmatpush.msra.mxu0 0.0
        %v946 = vand.u32 %v877, 4294901760
        %v947 = vsub.f32 %v877, %v946
        %948 = vmatpush.msra.mxu0 %v947
        %v949 = vand.u32 %v874, 4294901760
        %v950 = vsub.f32 %v874, %v949
        %951 = vmatmul.f32.gmra.mxu0 %v950
        %v952 = vpop.f32.mrf.mxu0
        %v953 = vadd.f32 %v929, %v952
        %954 = vdwg.mxu0
        %955 = vmatpush.msra.mxu0 0.0
        %956 = vmatpush.msra.mxu0 0.0
        %957 = vmatpush.msra.mxu0 0.0
        %958 = vmatpush.msra.mxu0 0.0
        %959 = vmatpush.msra.mxu0 0.0
        %960 = vmatpush.msra.mxu0 0.0
        %961 = vmatpush.msra.mxu0 0.0
        %962 = vmatpush.msra.mxu0 0.0
        %963 = vmatpush.msra.mxu0 0.0
        %964 = vmatpush.msra.mxu0 0.0
        %965 = vmatpush.msra.mxu0 0.0
        %966 = vmatpush.msra.mxu0 0.0
        %967 = vmatpush.msra.mxu0 0.0
        %968 = vmatpush.msra.mxu0 0.0
        %969 = vmatpush.msra.mxu0 0.0
        %v970 = vand.u32 %v877, 4294901760
        %971 = vmatpush.msra.mxu0 %v970
        %v972 = vand.u32 %v874, 4294901760
        %v973 = vsub.f32 %v874, %v972
        %v974 = vand.u32 %v973, 4294901760
        %975 = vmatmul.f32.gmra.mxu0 %v974
        %v976 = vpop.f32.mrf.mxu0
        %v977 = vadd.f32 %v953, %v976
        %978 = vdwg.mxu0
        %979 = vmatpush.msra.mxu0 0.0
        %980 = vmatpush.msra.mxu0 0.0
        %981 = vmatpush.msra.mxu0 0.0
        %982 = vmatpush.msra.mxu0 0.0
        %983 = vmatpush.msra.mxu0 0.0
        %984 = vmatpush.msra.mxu0 0.0
        %985 = vmatpush.msra.mxu0 0.0
        %986 = vmatpush.msra.mxu0 0.0
        %987 = vmatpush.msra.mxu0 0.0
        %988 = vmatpush.msra.mxu0 0.0
        %989 = vmatpush.msra.mxu0 0.0
        %990 = vmatpush.msra.mxu0 0.0
        %991 = vmatpush.msra.mxu0 0.0
        %992 = vmatpush.msra.mxu0 0.0
        %993 = vmatpush.msra.mxu0 0.0
        %v994 = vand.u32 %v877, 4294901760
        %v995 = vsub.f32 %v877, %v994
        %v996 = vand.u32 %v995, 4294901760
        %997 = vmatpush.msra.mxu0 %v996
        %v998 = vand.u32 %v874, 4294901760
        %999 = vmatmul.f32.gmra.mxu0 %v998
        %v1000 = vpop.f32.mrf.mxu0
        %v1001 = vadd.f32 %v977, %v1000
        %1002 = vdwg.mxu0
        %1003 = vmatpush.msra.mxu0 0.0
        %1004 = vmatpush.msra.mxu0 0.0
        %1005 = vmatpush.msra.mxu0 0.0
        %1006 = vmatpush.msra.mxu0 0.0
        %1007 = vmatpush.msra.mxu0 0.0
        %1008 = vmatpush.msra.mxu0 0.0
        %1009 = vmatpush.msra.mxu0 0.0
        %1010 = vmatpush.msra.mxu0 0.0
        %1011 = vmatpush.msra.mxu0 0.0
        %1012 = vmatpush.msra.mxu0 0.0
        %1013 = vmatpush.msra.mxu0 0.0
        %1014 = vmatpush.msra.mxu0 0.0
        %1015 = vmatpush.msra.mxu0 0.0
        %1016 = vmatpush.msra.mxu0 0.0
        %1017 = vmatpush.msra.mxu0 0.0
        %v1018 = vand.u32 %v877, 4294901760
        %1019 = vmatpush.msra.mxu0 %v1018
        %v1020 = vand.u32 %v874, 4294901760
        %1021 = vmatmul.f32.gmra.mxu0 %v1020
        %v1022 = vpop.f32.mrf.mxu0
        %v1023 = vadd.f32 %v1001, %v1022
        %1024 = vdwg.mxu0
        %v1025 = vadd.f32 %v868, %v1023
        %s1026 = scalar_lea.vmem %s1, 40
        %v1027 = vld [vmem:[%s1026] sm:$0xff]
        %1028 = vrot.lane.b32.xlu0 %v713, 127
        %v1029 = vpop.permute.xlu0 %1028
        %v1031 = vsel %vm250, %v1027, 0
        %v1033 = vsel %vm254, %v1029, 0
        %1035 = vmatpush.msra.mxu0 0.0
        %1036 = vmatpush.msra.mxu0 0.0
        %1037 = vmatpush.msra.mxu0 0.0
        %1038 = vmatpush.msra.mxu0 0.0
        %1039 = vmatpush.msra.mxu0 0.0
        %1040 = vmatpush.msra.mxu0 0.0
        %1041 = vmatpush.msra.mxu0 0.0
        %1042 = vmatpush.msra.mxu0 0.0
        %1043 = vmatpush.msra.mxu0 0.0
        %1044 = vmatpush.msra.mxu0 0.0
        %1045 = vmatpush.msra.mxu0 0.0
        %1046 = vmatpush.msra.mxu0 0.0
        %1047 = vmatpush.msra.mxu0 0.0
        %1048 = vmatpush.msra.mxu0 0.0
        %1049 = vmatpush.msra.mxu0 0.0
        %v1050 = vand.u32 %v1033, 4294901760
        %1051 = vmatpush.msra.mxu0 %v1050
        %v1052 = vand.u32 %v1031, 4294901760
        %v1053 = vsub.f32 %v1031, %v1052
        %v1054 = vand.u32 %v1053, 4294901760
        %v1055 = vsub.f32 %v1053, %v1054
        %v1056 = vand.u32 %v1055, 4294901760
        %1057 = vmatmul.f32.gmra.mxu0 %v1056
        %v1058 = vpop.f32.mrf.mxu0
        %v1059 = vadd.f32 0.0, %v1058
        %1060 = vdwg.mxu0
        %1061 = vmatpush.msra.mxu0 0.0
        %1062 = vmatpush.msra.mxu0 0.0
        %1063 = vmatpush.msra.mxu0 0.0
        %1064 = vmatpush.msra.mxu0 0.0
        %1065 = vmatpush.msra.mxu0 0.0
        %1066 = vmatpush.msra.mxu0 0.0
        %1067 = vmatpush.msra.mxu0 0.0
        %1068 = vmatpush.msra.mxu0 0.0
        %1069 = vmatpush.msra.mxu0 0.0
        %1070 = vmatpush.msra.mxu0 0.0
        %1071 = vmatpush.msra.mxu0 0.0
        %1072 = vmatpush.msra.mxu0 0.0
        %1073 = vmatpush.msra.mxu0 0.0
        %1074 = vmatpush.msra.mxu0 0.0
        %1075 = vmatpush.msra.mxu0 0.0
        %v1076 = vand.u32 %v1033, 4294901760
        %v1077 = vsub.f32 %v1033, %v1076
        %v1078 = vand.u32 %v1077, 4294901760
        %v1079 = vsub.f32 %v1077, %v1078
        %v1080 = vand.u32 %v1079, 4294901760
        %1081 = vmatpush.msra.mxu0 %v1080
        %v1082 = vand.u32 %v1031, 4294901760
        %1083 = vmatmul.f32.gmra.mxu0 %v1082
        %v1084 = vpop.f32.mrf.mxu0
        %v1085 = vadd.f32 %v1059, %v1084
        %1086 = vdwg.mxu0
        %1087 = vmatpush.msra.mxu0 0.0
        %1088 = vmatpush.msra.mxu0 0.0
        %1089 = vmatpush.msra.mxu0 0.0
        %1090 = vmatpush.msra.mxu0 0.0
        %1091 = vmatpush.msra.mxu0 0.0
        %1092 = vmatpush.msra.mxu0 0.0
        %1093 = vmatpush.msra.mxu0 0.0
        %1094 = vmatpush.msra.mxu0 0.0
        %1095 = vmatpush.msra.mxu0 0.0
        %1096 = vmatpush.msra.mxu0 0.0
        %1097 = vmatpush.msra.mxu0 0.0
        %1098 = vmatpush.msra.mxu0 0.0
        %1099 = vmatpush.msra.mxu0 0.0
        %1100 = vmatpush.msra.mxu0 0.0
        %1101 = vmatpush.msra.mxu0 0.0
        %v1102 = vand.u32 %v1033, 4294901760
        %v1103 = vsub.f32 %v1033, %v1102
        %1104 = vmatpush.msra.mxu0 %v1103
        %v1105 = vand.u32 %v1031, 4294901760
        %v1106 = vsub.f32 %v1031, %v1105
        %1107 = vmatmul.f32.gmra.mxu0 %v1106
        %v1108 = vpop.f32.mrf.mxu0
        %v1109 = vadd.f32 %v1085, %v1108
        %1110 = vdwg.mxu0
        %1111 = vmatpush.msra.mxu0 0.0
        %1112 = vmatpush.msra.mxu0 0.0
        %1113 = vmatpush.msra.mxu0 0.0
        %1114 = vmatpush.msra.mxu0 0.0
        %1115 = vmatpush.msra.mxu0 0.0
        %1116 = vmatpush.msra.mxu0 0.0
        %1117 = vmatpush.msra.mxu0 0.0
        %1118 = vmatpush.msra.mxu0 0.0
        %1119 = vmatpush.msra.mxu0 0.0
        %1120 = vmatpush.msra.mxu0 0.0
        %1121 = vmatpush.msra.mxu0 0.0
        %1122 = vmatpush.msra.mxu0 0.0
        %1123 = vmatpush.msra.mxu0 0.0
        %1124 = vmatpush.msra.mxu0 0.0
        %1125 = vmatpush.msra.mxu0 0.0
        %v1126 = vand.u32 %v1033, 4294901760
        %1127 = vmatpush.msra.mxu0 %v1126
        %v1128 = vand.u32 %v1031, 4294901760
        %v1129 = vsub.f32 %v1031, %v1128
        %v1130 = vand.u32 %v1129, 4294901760
        %1131 = vmatmul.f32.gmra.mxu0 %v1130
        %v1132 = vpop.f32.mrf.mxu0
        %v1133 = vadd.f32 %v1109, %v1132
        %1134 = vdwg.mxu0
        %1135 = vmatpush.msra.mxu0 0.0
        %1136 = vmatpush.msra.mxu0 0.0
        %1137 = vmatpush.msra.mxu0 0.0
        %1138 = vmatpush.msra.mxu0 0.0
        %1139 = vmatpush.msra.mxu0 0.0
        %1140 = vmatpush.msra.mxu0 0.0
        %1141 = vmatpush.msra.mxu0 0.0
        %1142 = vmatpush.msra.mxu0 0.0
        %1143 = vmatpush.msra.mxu0 0.0
        %1144 = vmatpush.msra.mxu0 0.0
        %1145 = vmatpush.msra.mxu0 0.0
        %1146 = vmatpush.msra.mxu0 0.0
        %1147 = vmatpush.msra.mxu0 0.0
        %1148 = vmatpush.msra.mxu0 0.0
        %1149 = vmatpush.msra.mxu0 0.0
        %v1150 = vand.u32 %v1033, 4294901760
        %v1151 = vsub.f32 %v1033, %v1150
        %v1152 = vand.u32 %v1151, 4294901760
        %1153 = vmatpush.msra.mxu0 %v1152
        %v1154 = vand.u32 %v1031, 4294901760
        %1155 = vmatmul.f32.gmra.mxu0 %v1154
        %v1156 = vpop.f32.mrf.mxu0
        %v1157 = vadd.f32 %v1133, %v1156
        %1158 = vdwg.mxu0
        %1159 = vmatpush.msra.mxu0 0.0
        %1160 = vmatpush.msra.mxu0 0.0
        %1161 = vmatpush.msra.mxu0 0.0
        %1162 = vmatpush.msra.mxu0 0.0
        %1163 = vmatpush.msra.mxu0 0.0
        %1164 = vmatpush.msra.mxu0 0.0
        %1165 = vmatpush.msra.mxu0 0.0
        %1166 = vmatpush.msra.mxu0 0.0
        %1167 = vmatpush.msra.mxu0 0.0
        %1168 = vmatpush.msra.mxu0 0.0
        %1169 = vmatpush.msra.mxu0 0.0
        %1170 = vmatpush.msra.mxu0 0.0
        %1171 = vmatpush.msra.mxu0 0.0
        %1172 = vmatpush.msra.mxu0 0.0
        %1173 = vmatpush.msra.mxu0 0.0
        %v1174 = vand.u32 %v1033, 4294901760
        %1175 = vmatpush.msra.mxu0 %v1174
        %v1176 = vand.u32 %v1031, 4294901760
        %1177 = vmatmul.f32.gmra.mxu0 %v1176
        %v1178 = vpop.f32.mrf.mxu0
        %v1179 = vadd.f32 %v1157, %v1178
        %1180 = vdwg.mxu0
        %v1181 = vadd.f32 %v1025, %v1179
        %s1182 = scalar_lea.vmem %s1, 48
        %v1183 = vld [vmem:[%s1182] sm:$0xff]
        %1184 = vrot.lane.b32.xlu0 %v244, 119
        %v1185 = vpop.permute.xlu0 %1184
        %v1187 = vsel %vm250, %v1183, 0
        %v1189 = vsel %vm254, %v1185, 0
        %1191 = vmatpush.msra.mxu0 0.0
        %1192 = vmatpush.msra.mxu0 0.0
        %1193 = vmatpush.msra.mxu0 0.0
        %1194 = vmatpush.msra.mxu0 0.0
        %1195 = vmatpush.msra.mxu0 0.0
        %1196 = vmatpush.msra.mxu0 0.0
        %1197 = vmatpush.msra.mxu0 0.0
        %1198 = vmatpush.msra.mxu0 0.0
        %1199 = vmatpush.msra.mxu0 0.0
        %1200 = vmatpush.msra.mxu0 0.0
        %1201 = vmatpush.msra.mxu0 0.0
        %1202 = vmatpush.msra.mxu0 0.0
        %1203 = vmatpush.msra.mxu0 0.0
        %1204 = vmatpush.msra.mxu0 0.0
        %1205 = vmatpush.msra.mxu0 0.0
        %v1206 = vand.u32 %v1189, 4294901760
        %1207 = vmatpush.msra.mxu0 %v1206
        %v1208 = vand.u32 %v1187, 4294901760
        %v1209 = vsub.f32 %v1187, %v1208
        %v1210 = vand.u32 %v1209, 4294901760
        %v1211 = vsub.f32 %v1209, %v1210
        %v1212 = vand.u32 %v1211, 4294901760
        %1213 = vmatmul.f32.gmra.mxu0 %v1212
        %v1214 = vpop.f32.mrf.mxu0
        %v1215 = vadd.f32 0.0, %v1214
        %1216 = vdwg.mxu0
        %1217 = vmatpush.msra.mxu0 0.0
        %1218 = vmatpush.msra.mxu0 0.0
        %1219 = vmatpush.msra.mxu0 0.0
        %1220 = vmatpush.msra.mxu0 0.0
        %1221 = vmatpush.msra.mxu0 0.0
        %1222 = vmatpush.msra.mxu0 0.0
        %1223 = vmatpush.msra.mxu0 0.0
        %1224 = vmatpush.msra.mxu0 0.0
        %1225 = vmatpush.msra.mxu0 0.0
        %1226 = vmatpush.msra.mxu0 0.0
        %1227 = vmatpush.msra.mxu0 0.0
        %1228 = vmatpush.msra.mxu0 0.0
        %1229 = vmatpush.msra.mxu0 0.0
        %1230 = vmatpush.msra.mxu0 0.0
        %1231 = vmatpush.msra.mxu0 0.0
        %v1232 = vand.u32 %v1189, 4294901760
        %v1233 = vsub.f32 %v1189, %v1232
        %v1234 = vand.u32 %v1233, 4294901760
        %v1235 = vsub.f32 %v1233, %v1234
        %v1236 = vand.u32 %v1235, 4294901760
        %1237 = vmatpush.msra.mxu0 %v1236
        %v1238 = vand.u32 %v1187, 4294901760
        %1239 = vmatmul.f32.gmra.mxu0 %v1238
        %v1240 = vpop.f32.mrf.mxu0
        %v1241 = vadd.f32 %v1215, %v1240
        %1242 = vdwg.mxu0
        %1243 = vmatpush.msra.mxu0 0.0
        %1244 = vmatpush.msra.mxu0 0.0
        %1245 = vmatpush.msra.mxu0 0.0
        %1246 = vmatpush.msra.mxu0 0.0
        %1247 = vmatpush.msra.mxu0 0.0
        %1248 = vmatpush.msra.mxu0 0.0
        %1249 = vmatpush.msra.mxu0 0.0
        %1250 = vmatpush.msra.mxu0 0.0
        %1251 = vmatpush.msra.mxu0 0.0
        %1252 = vmatpush.msra.mxu0 0.0
        %1253 = vmatpush.msra.mxu0 0.0
        %1254 = vmatpush.msra.mxu0 0.0
        %1255 = vmatpush.msra.mxu0 0.0
        %1256 = vmatpush.msra.mxu0 0.0
        %1257 = vmatpush.msra.mxu0 0.0
        %v1258 = vand.u32 %v1189, 4294901760
        %v1259 = vsub.f32 %v1189, %v1258
        %1260 = vmatpush.msra.mxu0 %v1259
        %v1261 = vand.u32 %v1187, 4294901760
        %v1262 = vsub.f32 %v1187, %v1261
        %1263 = vmatmul.f32.gmra.mxu0 %v1262
        %v1264 = vpop.f32.mrf.mxu0
        %v1265 = vadd.f32 %v1241, %v1264
        %1266 = vdwg.mxu0
        %1267 = vmatpush.msra.mxu0 0.0
        %1268 = vmatpush.msra.mxu0 0.0
        %1269 = vmatpush.msra.mxu0 0.0
        %1270 = vmatpush.msra.mxu0 0.0
        %1271 = vmatpush.msra.mxu0 0.0
        %1272 = vmatpush.msra.mxu0 0.0
        %1273 = vmatpush.msra.mxu0 0.0
        %1274 = vmatpush.msra.mxu0 0.0
        %1275 = vmatpush.msra.mxu0 0.0
        %1276 = vmatpush.msra.mxu0 0.0
        %1277 = vmatpush.msra.mxu0 0.0
        %1278 = vmatpush.msra.mxu0 0.0
        %1279 = vmatpush.msra.mxu0 0.0
        %1280 = vmatpush.msra.mxu0 0.0
        %1281 = vmatpush.msra.mxu0 0.0
        %v1282 = vand.u32 %v1189, 4294901760
        %1283 = vmatpush.msra.mxu0 %v1282
        %v1284 = vand.u32 %v1187, 4294901760
        %v1285 = vsub.f32 %v1187, %v1284
        %v1286 = vand.u32 %v1285, 4294901760
        %1287 = vmatmul.f32.gmra.mxu0 %v1286
        %v1288 = vpop.f32.mrf.mxu0
        %v1289 = vadd.f32 %v1265, %v1288
        %1290 = vdwg.mxu0
        %1291 = vmatpush.msra.mxu0 0.0
        %1292 = vmatpush.msra.mxu0 0.0
        %1293 = vmatpush.msra.mxu0 0.0
        %1294 = vmatpush.msra.mxu0 0.0
        %1295 = vmatpush.msra.mxu0 0.0
        %1296 = vmatpush.msra.mxu0 0.0
        %1297 = vmatpush.msra.mxu0 0.0
        %1298 = vmatpush.msra.mxu0 0.0
        %1299 = vmatpush.msra.mxu0 0.0
        %1300 = vmatpush.msra.mxu0 0.0
        %1301 = vmatpush.msra.mxu0 0.0
        %1302 = vmatpush.msra.mxu0 0.0
        %1303 = vmatpush.msra.mxu0 0.0
        %1304 = vmatpush.msra.mxu0 0.0
        %1305 = vmatpush.msra.mxu0 0.0
        %v1306 = vand.u32 %v1189, 4294901760
        %v1307 = vsub.f32 %v1189, %v1306
        %v1308 = vand.u32 %v1307, 4294901760
        %1309 = vmatpush.msra.mxu0 %v1308
        %v1310 = vand.u32 %v1187, 4294901760
        %1311 = vmatmul.f32.gmra.mxu0 %v1310
        %v1312 = vpop.f32.mrf.mxu0
        %v1313 = vadd.f32 %v1289, %v1312
        %1314 = vdwg.mxu0
        %1315 = vmatpush.msra.mxu0 0.0
        %1316 = vmatpush.msra.mxu0 0.0
        %1317 = vmatpush.msra.mxu0 0.0
        %1318 = vmatpush.msra.mxu0 0.0
        %1319 = vmatpush.msra.mxu0 0.0
        %1320 = vmatpush.msra.mxu0 0.0
        %1321 = vmatpush.msra.mxu0 0.0
        %1322 = vmatpush.msra.mxu0 0.0
        %1323 = vmatpush.msra.mxu0 0.0
        %1324 = vmatpush.msra.mxu0 0.0
        %1325 = vmatpush.msra.mxu0 0.0
        %1326 = vmatpush.msra.mxu0 0.0
        %1327 = vmatpush.msra.mxu0 0.0
        %1328 = vmatpush.msra.mxu0 0.0
        %1329 = vmatpush.msra.mxu0 0.0
        %v1330 = vand.u32 %v1189, 4294901760
        %1331 = vmatpush.msra.mxu0 %v1330
        %v1332 = vand.u32 %v1187, 4294901760
        %1333 = vmatmul.f32.gmra.mxu0 %v1332
        %v1334 = vpop.f32.mrf.mxu0
        %v1335 = vadd.f32 %v1313, %v1334
        %1336 = vdwg.mxu0
        %v1337 = vadd.f32 %v1181, %v1335
        %s1338 = scalar_lea.vmem %s1, 56
        %v1339 = vld [vmem:[%s1338] sm:$0xff]
        %1340 = vrot.lane.b32.xlu0 %v247, 119
        %v1341 = vpop.permute.xlu0 %1340
        %v1343 = vsel %vm250, %v1339, 0
        %v1345 = vsel %vm254, %v1341, 0
        %1347 = vmatpush.msra.mxu0 0.0
        %1348 = vmatpush.msra.mxu0 0.0
        %1349 = vmatpush.msra.mxu0 0.0
        %1350 = vmatpush.msra.mxu0 0.0
        %1351 = vmatpush.msra.mxu0 0.0
        %1352 = vmatpush.msra.mxu0 0.0
        %1353 = vmatpush.msra.mxu0 0.0
        %1354 = vmatpush.msra.mxu0 0.0
        %1355 = vmatpush.msra.mxu0 0.0
        %1356 = vmatpush.msra.mxu0 0.0
        %1357 = vmatpush.msra.mxu0 0.0
        %1358 = vmatpush.msra.mxu0 0.0
        %1359 = vmatpush.msra.mxu0 0.0
        %1360 = vmatpush.msra.mxu0 0.0
        %1361 = vmatpush.msra.mxu0 0.0
        %v1362 = vand.u32 %v1345, 4294901760
        %1363 = vmatpush.msra.mxu0 %v1362
        %v1364 = vand.u32 %v1343, 4294901760
        %v1365 = vsub.f32 %v1343, %v1364
        %v1366 = vand.u32 %v1365, 4294901760
        %v1367 = vsub.f32 %v1365, %v1366
        %v1368 = vand.u32 %v1367, 4294901760
        %1369 = vmatmul.f32.gmra.mxu0 %v1368
        %v1370 = vpop.f32.mrf.mxu0
        %v1371 = vadd.f32 0.0, %v1370
        %1372 = vdwg.mxu0
        %1373 = vmatpush.msra.mxu0 0.0
        %1374 = vmatpush.msra.mxu0 0.0
        %1375 = vmatpush.msra.mxu0 0.0
        %1376 = vmatpush.msra.mxu0 0.0
        %1377 = vmatpush.msra.mxu0 0.0
        %1378 = vmatpush.msra.mxu0 0.0
        %1379 = vmatpush.msra.mxu0 0.0
        %1380 = vmatpush.msra.mxu0 0.0
        %1381 = vmatpush.msra.mxu0 0.0
        %1382 = vmatpush.msra.mxu0 0.0
        %1383 = vmatpush.msra.mxu0 0.0
        %1384 = vmatpush.msra.mxu0 0.0
        %1385 = vmatpush.msra.mxu0 0.0
        %1386 = vmatpush.msra.mxu0 0.0
        %1387 = vmatpush.msra.mxu0 0.0
        %v1388 = vand.u32 %v1345, 4294901760
        %v1389 = vsub.f32 %v1345, %v1388
        %v1390 = vand.u32 %v1389, 4294901760
        %v1391 = vsub.f32 %v1389, %v1390
        %v1392 = vand.u32 %v1391, 4294901760
        %1393 = vmatpush.msra.mxu0 %v1392
        %v1394 = vand.u32 %v1343, 4294901760
        %1395 = vmatmul.f32.gmra.mxu0 %v1394
        %v1396 = vpop.f32.mrf.mxu0
        %v1397 = vadd.f32 %v1371, %v1396
        %1398 = vdwg.mxu0
        %1399 = vmatpush.msra.mxu0 0.0
        %1400 = vmatpush.msra.mxu0 0.0
        %1401 = vmatpush.msra.mxu0 0.0
        %1402 = vmatpush.msra.mxu0 0.0
        %1403 = vmatpush.msra.mxu0 0.0
        %1404 = vmatpush.msra.mxu0 0.0
        %1405 = vmatpush.msra.mxu0 0.0
        %1406 = vmatpush.msra.mxu0 0.0
        %1407 = vmatpush.msra.mxu0 0.0
        %1408 = vmatpush.msra.mxu0 0.0
        %1409 = vmatpush.msra.mxu0 0.0
        %1410 = vmatpush.msra.mxu0 0.0
        %1411 = vmatpush.msra.mxu0 0.0
        %1412 = vmatpush.msra.mxu0 0.0
        %1413 = vmatpush.msra.mxu0 0.0
        %v1414 = vand.u32 %v1345, 4294901760
        %v1415 = vsub.f32 %v1345, %v1414
        %1416 = vmatpush.msra.mxu0 %v1415
        %v1417 = vand.u32 %v1343, 4294901760
        %v1418 = vsub.f32 %v1343, %v1417
        %1419 = vmatmul.f32.gmra.mxu0 %v1418
        %v1420 = vpop.f32.mrf.mxu0
        %v1421 = vadd.f32 %v1397, %v1420
        %1422 = vdwg.mxu0
        %1423 = vmatpush.msra.mxu0 0.0
        %1424 = vmatpush.msra.mxu0 0.0
        %1425 = vmatpush.msra.mxu0 0.0
        %1426 = vmatpush.msra.mxu0 0.0
        %1427 = vmatpush.msra.mxu0 0.0
        %1428 = vmatpush.msra.mxu0 0.0
        %1429 = vmatpush.msra.mxu0 0.0
        %1430 = vmatpush.msra.mxu0 0.0
        %1431 = vmatpush.msra.mxu0 0.0
        %1432 = vmatpush.msra.mxu0 0.0
        %1433 = vmatpush.msra.mxu0 0.0
        %1434 = vmatpush.msra.mxu0 0.0
        %1435 = vmatpush.msra.mxu0 0.0
        %1436 = vmatpush.msra.mxu0 0.0
        %1437 = vmatpush.msra.mxu0 0.0
        %v1438 = vand.u32 %v1345, 4294901760
        %1439 = vmatpush.msra.mxu0 %v1438
        %v1440 = vand.u32 %v1343, 4294901760
        %v1441 = vsub.f32 %v1343, %v1440
        %v1442 = vand.u32 %v1441, 4294901760
        %1443 = vmatmul.f32.gmra.mxu0 %v1442
        %v1444 = vpop.f32.mrf.mxu0
        %v1445 = vadd.f32 %v1421, %v1444
        %1446 = vdwg.mxu0
        %1447 = vmatpush.msra.mxu0 0.0
        %1448 = vmatpush.msra.mxu0 0.0
        %1449 = vmatpush.msra.mxu0 0.0
        %1450 = vmatpush.msra.mxu0 0.0
        %1451 = vmatpush.msra.mxu0 0.0
        %1452 = vmatpush.msra.mxu0 0.0
        %1453 = vmatpush.msra.mxu0 0.0
        %1454 = vmatpush.msra.mxu0 0.0
        %1455 = vmatpush.msra.mxu0 0.0
        %1456 = vmatpush.msra.mxu0 0.0
        %1457 = vmatpush.msra.mxu0 0.0
        %1458 = vmatpush.msra.mxu0 0.0
        %1459 = vmatpush.msra.mxu0 0.0
        %1460 = vmatpush.msra.mxu0 0.0
        %1461 = vmatpush.msra.mxu0 0.0
        %v1462 = vand.u32 %v1345, 4294901760
        %v1463 = vsub.f32 %v1345, %v1462
        %v1464 = vand.u32 %v1463, 4294901760
        %1465 = vmatpush.msra.mxu0 %v1464
        %v1466 = vand.u32 %v1343, 4294901760
        %1467 = vmatmul.f32.gmra.mxu0 %v1466
        %v1468 = vpop.f32.mrf.mxu0
        %v1469 = vadd.f32 %v1445, %v1468
        %1470 = vdwg.mxu0
        %1471 = vmatpush.msra.mxu0 0.0
        %1472 = vmatpush.msra.mxu0 0.0
        %1473 = vmatpush.msra.mxu0 0.0
        %1474 = vmatpush.msra.mxu0 0.0
        %1475 = vmatpush.msra.mxu0 0.0
        %1476 = vmatpush.msra.mxu0 0.0
        %1477 = vmatpush.msra.mxu0 0.0
        %1478 = vmatpush.msra.mxu0 0.0
        %1479 = vmatpush.msra.mxu0 0.0
        %1480 = vmatpush.msra.mxu0 0.0
        %1481 = vmatpush.msra.mxu0 0.0
        %1482 = vmatpush.msra.mxu0 0.0
        %1483 = vmatpush.msra.mxu0 0.0
        %1484 = vmatpush.msra.mxu0 0.0
        %1485 = vmatpush.msra.mxu0 0.0
        %v1486 = vand.u32 %v1345, 4294901760
        %1487 = vmatpush.msra.mxu0 %v1486
        %v1488 = vand.u32 %v1343, 4294901760
        %1489 = vmatmul.f32.gmra.mxu0 %v1488
        %v1490 = vpop.f32.mrf.mxu0
        %v1491 = vadd.f32 %v1469, %v1490
        %1492 = vdwg.mxu0
        %v1493 = vadd.f32 %v1337, %v1491
        %s1494 = scalar_lea.vmem %s1, 64
        %v1495 = vld [vmem:[%s1494] sm:$0xff]
        %1496 = vrot.lane.b32.xlu0 %v244, 118
        %v1497 = vpop.permute.xlu0 %1496
        %v1499 = vsel %vm250, %v1495, 0
        %v1501 = vsel %vm254, %v1497, 0
        %1503 = vmatpush.msra.mxu0 0.0
        %1504 = vmatpush.msra.mxu0 0.0
        %1505 = vmatpush.msra.mxu0 0.0
        %1506 = vmatpush.msra.mxu0 0.0
        %1507 = vmatpush.msra.mxu0 0.0
        %1508 = vmatpush.msra.mxu0 0.0
        %1509 = vmatpush.msra.mxu0 0.0
        %1510 = vmatpush.msra.mxu0 0.0
        %1511 = vmatpush.msra.mxu0 0.0
        %1512 = vmatpush.msra.mxu0 0.0
        %1513 = vmatpush.msra.mxu0 0.0
        %1514 = vmatpush.msra.mxu0 0.0
        %1515 = vmatpush.msra.mxu0 0.0
        %1516 = vmatpush.msra.mxu0 0.0
        %1517 = vmatpush.msra.mxu0 0.0
        %v1518 = vand.u32 %v1501, 4294901760
        %1519 = vmatpush.msra.mxu0 %v1518
        %v1520 = vand.u32 %v1499, 4294901760
        %v1521 = vsub.f32 %v1499, %v1520
        %v1522 = vand.u32 %v1521, 4294901760
        %v1523 = vsub.f32 %v1521, %v1522
        %v1524 = vand.u32 %v1523, 4294901760
        %1525 = vmatmul.f32.gmra.mxu0 %v1524
        %v1526 = vpop.f32.mrf.mxu0
        %v1527 = vadd.f32 0.0, %v1526
        %1528 = vdwg.mxu0
        %1529 = vmatpush.msra.mxu0 0.0
        %1530 = vmatpush.msra.mxu0 0.0
        %1531 = vmatpush.msra.mxu0 0.0
        %1532 = vmatpush.msra.mxu0 0.0
        %1533 = vmatpush.msra.mxu0 0.0
        %1534 = vmatpush.msra.mxu0 0.0
        %1535 = vmatpush.msra.mxu0 0.0
        %1536 = vmatpush.msra.mxu0 0.0
        %1537 = vmatpush.msra.mxu0 0.0
        %1538 = vmatpush.msra.mxu0 0.0
        %1539 = vmatpush.msra.mxu0 0.0
        %1540 = vmatpush.msra.mxu0 0.0
        %1541 = vmatpush.msra.mxu0 0.0
        %1542 = vmatpush.msra.mxu0 0.0
        %1543 = vmatpush.msra.mxu0 0.0
        %v1544 = vand.u32 %v1501, 4294901760
        %v1545 = vsub.f32 %v1501, %v1544
        %v1546 = vand.u32 %v1545, 4294901760
        %v1547 = vsub.f32 %v1545, %v1546
        %v1548 = vand.u32 %v1547, 4294901760
        %1549 = vmatpush.msra.mxu0 %v1548
        %v1550 = vand.u32 %v1499, 4294901760
        %1551 = vmatmul.f32.gmra.mxu0 %v1550
        %v1552 = vpop.f32.mrf.mxu0
        %v1553 = vadd.f32 %v1527, %v1552
        %1554 = vdwg.mxu0
        %1555 = vmatpush.msra.mxu0 0.0
        %1556 = vmatpush.msra.mxu0 0.0
        %1557 = vmatpush.msra.mxu0 0.0
        %1558 = vmatpush.msra.mxu0 0.0
        %1559 = vmatpush.msra.mxu0 0.0
        %1560 = vmatpush.msra.mxu0 0.0
        %1561 = vmatpush.msra.mxu0 0.0
        %1562 = vmatpush.msra.mxu0 0.0
        %1563 = vmatpush.msra.mxu0 0.0
        %1564 = vmatpush.msra.mxu0 0.0
        %1565 = vmatpush.msra.mxu0 0.0
        %1566 = vmatpush.msra.mxu0 0.0
        %1567 = vmatpush.msra.mxu0 0.0
        %1568 = vmatpush.msra.mxu0 0.0
        %1569 = vmatpush.msra.mxu0 0.0
        %v1570 = vand.u32 %v1501, 4294901760
        %v1571 = vsub.f32 %v1501, %v1570
        %1572 = vmatpush.msra.mxu0 %v1571
        %v1573 = vand.u32 %v1499, 4294901760
        %v1574 = vsub.f32 %v1499, %v1573
        %1575 = vmatmul.f32.gmra.mxu0 %v1574
        %v1576 = vpop.f32.mrf.mxu0
        %v1577 = vadd.f32 %v1553, %v1576
        %1578 = vdwg.mxu0
        %1579 = vmatpush.msra.mxu0 0.0
        %1580 = vmatpush.msra.mxu0 0.0
        %1581 = vmatpush.msra.mxu0 0.0
        %1582 = vmatpush.msra.mxu0 0.0
        %1583 = vmatpush.msra.mxu0 0.0
        %1584 = vmatpush.msra.mxu0 0.0
        %1585 = vmatpush.msra.mxu0 0.0
        %1586 = vmatpush.msra.mxu0 0.0
        %1587 = vmatpush.msra.mxu0 0.0
        %1588 = vmatpush.msra.mxu0 0.0
        %1589 = vmatpush.msra.mxu0 0.0
        %1590 = vmatpush.msra.mxu0 0.0
        %1591 = vmatpush.msra.mxu0 0.0
        %1592 = vmatpush.msra.mxu0 0.0
        %1593 = vmatpush.msra.mxu0 0.0
        %v1594 = vand.u32 %v1501, 4294901760
        %1595 = vmatpush.msra.mxu0 %v1594
        %v1596 = vand.u32 %v1499, 4294901760
        %v1597 = vsub.f32 %v1499, %v1596
        %v1598 = vand.u32 %v1597, 4294901760
        %1599 = vmatmul.f32.gmra.mxu0 %v1598
        %v1600 = vpop.f32.mrf.mxu0
        %v1601 = vadd.f32 %v1577, %v1600
        %1602 = vdwg.mxu0
        %1603 = vmatpush.msra.mxu0 0.0
        %1604 = vmatpush.msra.mxu0 0.0
        %1605 = vmatpush.msra.mxu0 0.0
        %1606 = vmatpush.msra.mxu0 0.0
        %1607 = vmatpush.msra.mxu0 0.0
        %1608 = vmatpush.msra.mxu0 0.0
        %1609 = vmatpush.msra.mxu0 0.0
        %1610 = vmatpush.msra.mxu0 0.0
        %1611 = vmatpush.msra.mxu0 0.0
        %1612 = vmatpush.msra.mxu0 0.0
        %1613 = vmatpush.msra.mxu0 0.0
        %1614 = vmatpush.msra.mxu0 0.0
        %1615 = vmatpush.msra.mxu0 0.0
        %1616 = vmatpush.msra.mxu0 0.0
        %1617 = vmatpush.msra.mxu0 0.0
        %v1618 = vand.u32 %v1501, 4294901760
        %v1619 = vsub.f32 %v1501, %v1618
        %v1620 = vand.u32 %v1619, 4294901760
        %1621 = vmatpush.msra.mxu0 %v1620
        %v1622 = vand.u32 %v1499, 4294901760
        %1623 = vmatmul.f32.gmra.mxu0 %v1622
        %v1624 = vpop.f32.mrf.mxu0
        %v1625 = vadd.f32 %v1601, %v1624
        %1626 = vdwg.mxu0
        %1627 = vmatpush.msra.mxu0 0.0
        %1628 = vmatpush.msra.mxu0 0.0
        %1629 = vmatpush.msra.mxu0 0.0
        %1630 = vmatpush.msra.mxu0 0.0
        %1631 = vmatpush.msra.mxu0 0.0
        %1632 = vmatpush.msra.mxu0 0.0
        %1633 = vmatpush.msra.mxu0 0.0
        %1634 = vmatpush.msra.mxu0 0.0
        %1635 = vmatpush.msra.mxu0 0.0
        %1636 = vmatpush.msra.mxu0 0.0
        %1637 = vmatpush.msra.mxu0 0.0
        %1638 = vmatpush.msra.mxu0 0.0
        %1639 = vmatpush.msra.mxu0 0.0
        %1640 = vmatpush.msra.mxu0 0.0
        %1641 = vmatpush.msra.mxu0 0.0
        %v1642 = vand.u32 %v1501, 4294901760
        %1643 = vmatpush.msra.mxu0 %v1642
        %v1644 = vand.u32 %v1499, 4294901760
        %1645 = vmatmul.f32.gmra.mxu0 %v1644
        %v1646 = vpop.f32.mrf.mxu0
        %v1647 = vadd.f32 %v1625, %v1646
        %1648 = vdwg.mxu0
        %v1649 = vadd.f32 %v1493, %v1647
        %vm1650 = vcmask 662528
        %1651 = vst.msk [vmem:[%s218] sm:$0xff] %vm1650, %v1649
        %v1652 = vld [vmem:[%s2] sm:$0x1]
        %v1654 = vperm.slane %v1652, 0
        %v1656 = vmul.f32 %v1649, %v1654
        %v1657 = vsel %vm1650, %v1656, 0.0
        %1658 = vadd.xlane.f32.xlu0 %v1657
        %v1659 = vpop.xlane.xlu0 %1658
        %vm1660 = vcmask 7168
        %1661 = vst.msk [vmem:[%s239] sm:$0xff] %vm1660, %v1659
        %v1662 = vmul.f32 %v1656, %v1649
        %v1663 = vsel %vm1650, %v1662, 0.0
        %1664 = vadd.xlane.f32.xlu0 %v1663
        %v1665 = vpop.xlane.xlu0 %1664
        %1666 = vst.msk [vmem:[%s243] sm:$0xff] %vm1660, %v1665
        %s1667 = sand.u32 %s96, 1
        %s1668 = scalar_lea.sflag [#allocation3], %s1667
        %s1669 = sand.u32 %s96, 1
        %s1670 = smul.addr %s1669, 8
        %s1671 = scalar_lea.vmem [#allocation2], %s1670
        %p1672 = scmp.lt.s32.totalorder %s20, 1
        %s1673 = scalar_select %p1672, %s20, 1
        %s1674 = smul.addr %s1673, 8
        %s1675 = scalar_lea.vmem %s4, %s1674
        %p1676 = scmp.lt.s32.totalorder %s20, 1
        %s1677 = scalar_select %p1676, %s20, 1
        %s1678 = smul.addr %s1677, 8
        %s1679 = scalar_lea.vmem %s5, %s1678
        // Predicated region
        $region33: #{tpu_custom_call.1} parent=31 // pred_check
          %p1680 = pneg %p106
        $region34: #{tpu_custom_call.1} parent=31 // pred_check_branch
          %1682 = sbr.rel (%p1680) target = $region36
        $region35: #{tpu_custom_call.1} parent=31 // pred_region
          %1684 = vsyncadd %s1668, 0
          %s1685 = smul.addr %s20, 8
          %s1686 = scalar_lea.hbm %s3, %s1685
          %s1688 = sshll.u32 %s1671, 4
          %s1689 = int_to_ptr.vmem [resolvable:$true] %s1688
          %s1690 = sshll.u32 %s1686, 4
          %s1691 = int_to_ptr.hbm [resolvable:$true] %s1690
          %1693 = dma.vmem_to_hbm [thread:$0]  %s1689, 128, %s1691, %s1668
        $region36: #{tpu_custom_call.1} parent=31 // pred_fallthru
          _
        // Predicated region
        $region37: #{tpu_custom_call.1} parent=31 // pred_check
          %p1694 = pneg %p132
        $region38: #{tpu_custom_call.1} parent=31 // pred_check_branch
          %1696 = sbr.rel (%p1694) target = $region40
        $region39: #{tpu_custom_call.1} parent=31 // pred_region
          _
        $region40: #{tpu_custom_call.1} parent=31 // pred_fallthru
          _
        // Predicated region
        $region41: #{tpu_custom_call.1} parent=31 // pred_check
          %p1697 = pneg %p158
        $region42: #{tpu_custom_call.1} parent=31 // pred_check_branch
          %1699 = sbr.rel (%p1697) target = $region44
        $region43: #{tpu_custom_call.1} parent=31 // pred_region
          _
        $region44: #{tpu_custom_call.1} parent=31 // pred_fallthru
          _
      $region32: #{tpu_custom_call.1} parent=5 // pred_fallthru
        _
      %p1700 = scmp.le.s32.totalorder 2, %s15
      // Predicated region
      $region45: #{tpu_custom_call.1} parent=5 // pred_check
        %p1701 = pneg %p1700
      $region46: #{tpu_custom_call.1} parent=5 // pred_check_branch
        %1703 = sbr.rel (%p1701) target = $region48
      $region47: #{tpu_custom_call.1} parent=5 // pred_region
        %s1704 = ssub.s32 %s15, 2
        // Predicated region
        $region49: #{tpu_custom_call.1} parent=47 // pred_check
          %p1705 = pneg %p112
        $region50: #{tpu_custom_call.1} parent=47 // pred_check_branch
          %1707 = sbr.rel (%p1705) target = $region52
        $region51: #{tpu_custom_call.1} parent=47 // pred_region
          %s1708 = sand.u32 %s97, 1
          %s1709 = scalar_lea.sflag [#allocation3], %s1708
          %s1710 = sand.u32 %s97, 1
          %s1711 = smul.addr %s1710, 8
          %s1712 = scalar_lea.vmem [#allocation2], %s1711
          %1714 = dma.done %s1709, 128
        $region52: #{tpu_custom_call.1} parent=47 // pred_fallthru
          _
        // Predicated region
        $region53: #{tpu_custom_call.1} parent=47 // pred_check
          %p1715 = pneg %p138
        $region54: #{tpu_custom_call.1} parent=47 // pred_check_branch
          %1717 = sbr.rel (%p1715) target = $region56
        $region55: #{tpu_custom_call.1} parent=47 // pred_region
          %p1718 = scmp.lt.s32.totalorder %s21, 1
          %s1719 = scalar_select %p1718, %s21, 1
          %s1720 = smul.addr %s1719, 8
          %s1721 = scalar_lea.vmem %s4, %s1720
        $region56: #{tpu_custom_call.1} parent=47 // pred_fallthru
          _
        // Predicated region
        $region57: #{tpu_custom_call.1} parent=47 // pred_check
          %p1722 = pneg %p164
        $region58: #{tpu_custom_call.1} parent=47 // pred_check_branch
          %1724 = sbr.rel (%p1722) target = $region60
        $region59: #{tpu_custom_call.1} parent=47 // pred_region
          %p1725 = scmp.lt.s32.totalorder %s21, 1
          %s1726 = scalar_select %p1725, %s21, 1
          %s1727 = smul.addr %s1726, 8
          %s1728 = scalar_lea.vmem %s5, %s1727
        $region60: #{tpu_custom_call.1} parent=47 // pred_fallthru
          _
      $region48: #{tpu_custom_call.1} parent=5 // pred_fallthru
        _
    $region6: #{tpu_custom_call.1} parent=1 // loop_footer
      %s19 = sadd.s32 1, %s15
    $region7: #{tpu_custom_call.1} parent=1 // loop_footer_branch
      %14 = sbr.rel target = $region3
    $region8: #{tpu_custom_call.1} parent=1 // loop_exit
      _
    %1729 = vsyncpa [#allocation3], 1
    %s1730 = scalar_lea.sflag [#allocation3], 1
    %1731 = vsyncpa %s1730, 1

</llo_original>
